<compile_context>
chip_gen: v6e
topology: v6e:2x2x1
jax: 0.10.0
libtpu: 0.0.40
codegen_flags: <defaults>
</compile_context>

<pallas_src>
import functools

import jax
import jax.numpy as jnp
from jax.experimental import pallas as pl
from jax.experimental.pallas import tpu as pltpu

_LANE = 128            # TPU lane width
_MAX_NODE_TILE = 1024  # max tile along node axes


def _round_up(n, m):
    return ((n + m - 1) // m) * m


def _pad_lanes(d):
    return _round_up(d, _LANE)


def _pad_dst(n):
    """dst (sublane) padding: 16 for bf16 packing, 32 so the tile can be split
    into >= 2 blocks for the two v7x TensorCores."""
    if n <= 16:
        return 16
    if n <= 2 * _MAX_NODE_TILE:
        return _round_up(n, 32)
    return _round_up(n, 256)


def _dst_tile(dp):
    if dp <= 16:
        return dp
    if dp <= 2 * _MAX_NODE_TILE:
        return dp // 2  # >= 2 blocks so both v7x TensorCores get work
    for t in (_MAX_NODE_TILE, 512, 256):
        if dp % t == 0:
            return t
    return 256


def _pad_src(n):
    """src (lane / MXU-K) padding: multiple of 128 -> lane-dense A tiles,
    full-K matmuls."""
    return _round_up(max(n, _LANE), _LANE)


def _src_tile(sp):
    if sp <= _MAX_NODE_TILE:
        return sp
    for t in (_MAX_NODE_TILE, 512, 256, 128):
        if sp % t == 0:
            return t
    return 128


def _col_tile(f_out):
    if f_out <= 512:
        return f_out
    for t in (512, 256, 128):
        if f_out % t == 0:
            return t
    return 128


@functools.lru_cache(maxsize=None)
def _vmem_limit_bytes():
    """~3/4 of physical VMEM, capped at 96 MiB: ~96 MiB on v5e/v6e (128 MiB),
    ~48 MiB on v7x (64 MiB)."""
    cap = 64 * 1024 * 1024
    try:
        info = pltpu.get_tpu_info()
        cap = int(getattr(info, "vmem_capacity_bytes", cap)) or cap
    except Exception:
        pass
    return min((cap * 3) // 4, 96 * 1024 * 1024)


# ---------------------------------------------------------------------------
# Kernels
# ---------------------------------------------------------------------------
def _project_kernel(x_ref, ns_ref, w_ref, o_ref):
    # x_ref : (tk, f_in)  bf16 src features
    # ns_ref: (tk, 1)     f32 out-degree^{-1/2}
    # w_ref : (f_in, tn)  bf16 weight column block
    # o_ref : (tk, tn)    bf16 projected + normalized features
    xw = jnp.dot(x_ref[...], w_ref[...], preferred_element_type=jnp.float32)
    o_ref[...] = (xw * ns_ref[...]).astype(o_ref.dtype)


def _aggregate_kernel(a_ref, xw_ref, nd_ref, b_ref, o_ref, acc_ref, *, apply_relu):
    # a_ref  : (tm, tk)  bf16 adjacency tile
    # xw_ref : (tk, tn)  bf16 projected src features
    # nd_ref : (tm, 1)   f32 in-degree^{-1/2}
    # b_ref  : (1, tn)   f32 bias
    # acc_ref: (tm, tn)  f32 accumulator (VMEM scratch)
    @pl.when(pl.program_id(2) == 0)
    def _init():
        acc_ref[...] = jnp.zeros_like(acc_ref)

    # native bf16 x bf16 MXU matmul, f32 accumulate
    acc_ref[...] += jnp.dot(a_ref[...], xw_ref[...],
                            preferred_element_type=jnp.float32)

    @pl.when(pl.program_id(2) == pl.num_programs(2) - 1)
    def _finalize():
        h = acc_ref[...] * nd_ref[...] + b_ref[...]
        if apply_relu:
            h = jnp.maximum(h, 0.0)
        o_ref[...] = h.astype(o_ref.dtype)


def _fused_kernel(a_ref, x_ref, ns_ref, w_ref, nd_ref, b_ref, o_ref,
                  acc_ref, xw_ref, *, apply_relu):
    # Single-kernel layer: XnW is computed once per src tile into a VMEM cache
    # (on the first dst tile), then the dst/src aggregation runs from VMEM.
    i = pl.program_id(0)
    k = pl.program_id(1)

    @pl.when(i == 0)
    def _project():
        xw = jnp.dot(x_ref[...], w_ref[...], preferred_element_type=jnp.float32)
        xw_ref[k] = (xw * ns_ref[...]).astype(xw_ref.dtype)

    @pl.when(k == 0)
    def _init():
        acc_ref[...] = jnp.zeros_like(acc_ref)

    acc_ref[...] += jnp.dot(a_ref[...], xw_ref[k],
                            preferred_element_type=jnp.float32)

    @pl.when(k == pl.num_programs(1) - 1)
    def _finalize():
        h = acc_ref[...] * nd_ref[...] + b_ref[...]
        if apply_relu:
            h = jnp.maximum(h, 0.0)
        o_ref[...] = h.astype(o_ref.dtype)


# ---------------------------------------------------------------------------
# One GraphConv layer
# ---------------------------------------------------------------------------
def graph_conv(a, norm_src, norm_dst, x, w, b, *, apply_relu, allow_fused=True):
    """a: (Dp, Sp) bf16; x: (Sp, Fin_p) bf16; w: (Fin_p, Fout_p) bf16;
    b: (1, Fout_p) f32; norm_src: (Sp, 1) f32; norm_dst: (Dp, 1) f32.
    Returns (Dp, Fout_p) bf16."""
    dp, sp = a.shape
    f_in, f_out = w.shape
    tm = _dst_tile(dp)
    tk = _src_tile(sp)
    n_k = sp // tk
    vmem = _vmem_limit_bytes()

    # Rough resident-VMEM estimate for the fused path (double-buffered streams).
    fused_bytes = (2 * tm * tk * 2            # A tiles (bf16)
                   + 2 * tk * f_in * 2        # x tiles (bf16)
                   + f_in * f_out * 2         # W resident (bf16)
                   + n_k * tk * f_out * 2     # XnW VMEM cache (bf16)
                   + tm * f_out * 4           # f32 accumulator
                   + 2 * tm * f_out * 2       # output tiles (bf16)
                   + 4 * (tk + tm) * 4 + f_out * 8)
    use_fused = (allow_fused and dp <= 2 * _MAX_NODE_TILE and f_out <= 512
                 and fused_bytes <= vmem // 2)

    if use_fused:
        kernel = functools.partial(_fused_kernel, apply_relu=apply_relu)
        return pl.pallas_call(
            kernel,
            grid_spec=pltpu.PrefetchScalarGridSpec(
                num_scalar_prefetch=0,
                grid=(dp // tm, n_k),
                in_specs=[
                    pl.BlockSpec((tm, tk), lambda i, k: (i, k)),      # A
                    pl.BlockSpec((tk, f_in), lambda i, k: (k, 0)),    # x
                    pl.BlockSpec((tk, 1), lambda i, k: (k, 0)),       # norm_src
                    pl.BlockSpec((f_in, f_out), lambda i, k: (0, 0)), # W (resident)
                    pl.BlockSpec((tm, 1), lambda i, k: (i, 0)),       # norm_dst
                    pl.BlockSpec((1, f_out), lambda i, k: (0, 0)),    # bias
                ],
                out_specs=pl.BlockSpec((tm, f_out), lambda i, k: (i, 0)),
                scratch_shapes=[
                    pltpu.VMEM((tm, f_out), jnp.float32),             # acc
                    pltpu.VMEM((n_k, tk, f_out), jnp.bfloat16),       # XnW cache
                ],
            ),
            out_shape=jax.ShapeDtypeStruct((dp, f_out), jnp.bfloat16),
            compiler_params=pltpu.CompilerParams(
                dimension_semantics=("arbitrary", "arbitrary"),
                vmem_limit_bytes=vmem),
        )(a, x, norm_src, w, norm_dst, b)

    # ------- large-graph path: two stages, XnW materialized once in HBM -------
    tn = _col_tile(f_out)

    # Stage 1: XnW = (x @ W) * norm_src  (src norm commutes with the projection)
    xw = pl.pallas_call(
        _project_kernel,
        grid=(n_k, f_out // tn),
        in_specs=[
            pl.BlockSpec((tk, f_in), lambda s, j: (s, 0)),
            pl.BlockSpec((tk, 1), lambda s, j: (s, 0)),
            pl.BlockSpec((f_in, tn), lambda s, j: (0, j)),
        ],
        out_specs=pl.BlockSpec((tk, tn), lambda s, j: (s, j)),
        out_shape=jax.ShapeDtypeStruct((sp, f_out), jnp.bfloat16),
        compiler_params=pltpu.CompilerParams(
            dimension_semantics=("parallel", "parallel"),
            vmem_limit_bytes=vmem),
    )(x, norm_src, w)

    # Stage 2: tiled aggregation A @ XnW, src as the trailing reduction axis.
    kernel = functools.partial(_aggregate_kernel, apply_relu=apply_relu)
    return pl.pallas_call(
        kernel,
        grid_spec=pltpu.PrefetchScalarGridSpec(
            num_scalar_prefetch=0,
            grid=(dp // tm, f_out // tn, n_k),
            in_specs=[
                pl.BlockSpec((tm, tk), lambda i, j, k: (i, k)),   # A (bf16)
                pl.BlockSpec((tk, tn), lambda i, j, k: (k, j)),   # XnW (bf16)
                pl.BlockSpec((tm, 1), lambda i, j, k: (i, 0)),    # norm_dst
                pl.BlockSpec((1, tn), lambda i, j, k: (0, j)),    # bias
            ],
            out_specs=pl.BlockSpec((tm, tn), lambda i, j, k: (i, j)),
            scratch_shapes=[pltpu.VMEM((tm, tn), jnp.float32)],
        ),
        out_shape=jax.ShapeDtypeStruct((dp, f_out), jnp.bfloat16),
        compiler_params=pltpu.CompilerParams(
            dimension_semantics=("parallel", "parallel", "arbitrary"),
            vmem_limit_bytes=vmem),
    )(a, xw, norm_dst, b)


# ---------------------------------------------------------------------------
# Graph / parameter preprocessing (one-time, outside the forward pass)
# ---------------------------------------------------------------------------
def prepare_block(adj):
    """Pad adjacency (dst to 16/32 sublanes, src to 128 lanes), cast to bf16
    (exact for 0/1), precompute clamped symmetric-norm degree vectors."""
    # TODO(synk): int8 (v5e/v6e) / fp8 (v7x) adjacency compression for very
    #             large HBM-bound graphs is not implemented.
    adj = jnp.asarray(adj, jnp.float32)
    n_dst, n_src = adj.shape
    dp, sp = _pad_dst(n_dst), _pad_src(n_src)
    a = jnp.zeros((dp, sp), jnp.float32).at[:n_dst, :n_src].set(adj)
    out_deg = jnp.clip(jnp.sum(a, axis=0), 1.0, None)   # (sp,)
    in_deg = jnp.clip(jnp.sum(a, axis=1), 1.0, None)    # (dp,)
    norm_src = (out_deg ** -0.5).reshape(sp, 1).astype(jnp.float32)
    norm_dst = (in_deg ** -0.5).reshape(dp, 1).astype(jnp.float32)
    return a.astype(jnp.bfloat16), norm_src, norm_dst, n_dst


def pad_params(weights, biases):
    """Zero-pad feature dims to 128 lanes; weights in bf16, biases in f32."""
    wp, bp = [], []
    for w, b in zip(weights, biases):
        d_in, d_out = w.shape
        dip, dop = _pad_lanes(d_in), _pad_lanes(d_out)
        w_p = jnp.zeros((dip, dop), jnp.float32).at[:d_in, :d_out].set(w)
        wp.append(w_p.astype(jnp.bfloat16))
        bp.append(jnp.zeros((1, dop), jnp.float32).at[0, :d_out].set(b))
    return wp, bp


def pad_features(x, n_rows_pad):
    n, d = x.shape
    x_p = jnp.zeros((n_rows_pad, _pad_lanes(d)), jnp.float32).at[:n, :d].set(x)
    return x_p.astype(jnp.bfloat16)


def init_gcn_params(key, in_feats, n_hidden, n_classes, n_layers):
    """Xavier-uniform weights, zero biases (matches DGL GraphConv init)."""
    dims = [in_feats] + [n_hidden] * (n_layers - 1) + [n_classes]
    weights, biases = [], []
    for i in range(n_layers):
        key, sub = jax.random.split(key)
        d_in, d_out = dims[i], dims[i + 1]
        limit = (6.0 / (d_in + d_out)) ** 0.5
        w = jax.random.uniform(sub, (d_in, d_out), jnp.float32, -limit, limit)
        weights.append(w)
        biases.append(jnp.zeros((d_out,), jnp.float32))
    return weights, biases


def _fit_rows(h, rows):
    """Match a layer's output row-padding to the next block's src row-padding.
    Extra rows multiply all-zero A columns downstream, so zero-padding is safe."""
    n = h.shape[0]
    if n == rows:
        return h
    if n > rows:
        return h[:rows]
    return jnp.pad(h, ((0, rows - n), (0, 0)))


# ---------------------------------------------------------------------------
# GCN forward (GraphConv stack; dropout is eval-mode identity)
# ---------------------------------------------------------------------------
def gcn_forward(blocks, features, weights, biases):
    h = features
    n = len(weights)
    for i in range(n):
        a, ns, nd = blocks[i]
        h = _fit_rows(h, a.shape[1])
        # if i != 0: h = dropout(h)  -> identity in eval mode
        h = graph_conv(a, ns, nd, h, weights[i], biases[i],
                       apply_relu=(i < n - 1))  # last layer: no activation
    return h


if __name__ == "__main__":
    key = jax.random.PRNGKey(0)

    # Small synthetic problem consistent with the module.
    in_feats, n_hidden, n_classes, n_layers = 16, 32, 8, 3
    node_counts = [64, 32, 16, 8]  # src/dst node counts per sampled block

    k_params, k_feat, *k_adj = jax.random.split(key, 2 + n_layers)
    weights, biases = init_gcn_params(k_params, in_feats, n_hidden,
                                      n_classes, n_layers)
    weights_p, biases_p = pad_params(weights, biases)

    features = jax.random.normal(k_feat, (node_counts[0], in_feats),
                                 jnp.float32)

    prepped = []
    for i in range(n_layers):
        n_dst, n_src = node_counts[i + 1], node_counts[i]
        adj = (jax.random.uniform(k_adj[i], (n_dst, n_src)) < 0.3)
        prepped.append(prepare_block(adj.astype(jnp.float32)))
    block_inputs = [p[:3] for p in prepped]

    x_p = pad_features(features, _pad_src(node_counts[0]))

    fwd = jax.jit(gcn_forward)
    out_p = fwd(block_inputs, x_p, weights_p, biases_p)
    out = out_p[:node_counts[-1], :n_classes].astype(jnp.float32)
    out = jax.block_until_ready(out)

    assert out.shape == (node_counts[-1], n_classes)
    assert bool(jnp.all(jnp.isfinite(out)))

    # Also smoke-test the large-graph (two-stage) path on one block.
    a0, ns0, nd0 = block_inputs[0]
    two_stage = jax.jit(functools.partial(graph_conv, apply_relu=True,
                                          allow_fused=False))
    h2 = two_stage(a0, ns0, nd0, x_p, weights_p[0], biases_p[0])
    h2 = jax.block_until_ready(h2)
    assert bool(jnp.all(jnp.isfinite(h2.astype(jnp.float32))))

    print("KERNEL_OK")
</pallas_src>

<mosaic_0001>
module attributes {stable_mosaic.version = 11 : i64} {
  func.func @_fused_kernel(%arg0: i32, %arg1: i32, %arg2: memref<16x128xbf16, #tpu.memory_space<vmem>>, %arg3: memref<128x128xbf16, #tpu.memory_space<vmem>>, %arg4: memref<128x1xf32, #tpu.memory_space<vmem>>, %arg5: memref<128x128xbf16, #tpu.memory_space<vmem>>, %arg6: memref<16x1xf32, #tpu.memory_space<vmem>>, %arg7: memref<1x128xf32, #tpu.memory_space<vmem>>, %arg8: memref<16x128xbf16, #tpu.memory_space<vmem>>, %arg9: memref<16x128xf32, #tpu.memory_space<vmem>>, %arg10: memref<1x128x128xbf16, #tpu.memory_space<vmem>>) attributes {dimension_semantics = [#tpu.dimension_semantics<arbitrary>, #tpu.dimension_semantics<arbitrary>], iteration_bounds = array<i64: 2, 1>, scalar_prefetch = 0 : i64, scratch_operands = 2 : i64, tpu.core_type = #tpu.core_type<tc>, window_params = [{transform_indices = @transform_0, window_bounds = array<i64: 16, 128>}, {transform_indices = @transform_1, window_bounds = array<i64: 128, 128>}, {transform_indices = @transform_2, window_bounds = array<i64: 128, 1>}, {pipeline_mode = #tpu.pipeline_mode<synchronous>, transform_indices = @transform_3, window_bounds = array<i64: 128, 128>}, {transform_indices = @transform_4, window_bounds = array<i64: 16, 1>}, {pipeline_mode = #tpu.pipeline_mode<synchronous>, transform_indices = @transform_5, window_bounds = array<i64: 1, 128>}, {transform_indices = @transform_6, window_bounds = array<i64: 16, 128>}]} {
    %c0_i32 = arith.constant 0 : i32
    %0 = arith.cmpi eq, %arg0, %c0_i32 : i32
    %1 = arith.extui %0 : i1 to i32
    %c0_i32_0 = arith.constant 0 : i32
    %2 = arith.cmpi ne, %1, %c0_i32_0 : i32
    scf.if %2 {
      %c0_12 = arith.constant 0 : index
      %c0_13 = arith.constant 0 : index
      %17 = vector.load %arg3[%c0_12, %c0_13] : memref<128x128xbf16, #tpu.memory_space<vmem>>, vector<128x128xbf16>
      %c0_14 = arith.constant 0 : index
      %c0_15 = arith.constant 0 : index
      %18 = vector.load %arg5[%c0_14, %c0_15] : memref<128x128xbf16, #tpu.memory_space<vmem>>, vector<128x128xbf16>
      %cst_16 = arith.constant dense<0.000000e+00> : vector<128x128xf32>
      %19 = tpu.matmul %17, %18, %cst_16 {dimension_numbers = #tpu.dot_dimension_numbers<[1], [0], [0], [1], [0, 0, 1, 1], [], []>} : vector<128x128xbf16>, vector<128x128xbf16>, vector<128x128xf32> -> vector<128x128xf32>
      %c0_17 = arith.constant 0 : index
      %c0_18 = arith.constant 0 : index
      %20 = vector.load %arg4[%c0_17, %c0_18] : memref<128x1xf32, #tpu.memory_space<vmem>>, vector<128x1xf32>
      %21 = vector.broadcast %20 : vector<128x1xf32> to vector<128x128xf32>
      %22 = arith.mulf %19, %21 : vector<128x128xf32>
      %23 = arith.truncf %22 : vector<128x128xf32> to vector<128x128xbf16>
      %24 = arith.index_cast %arg1 : i32 to index
      %c0_19 = arith.constant 0 : index
      %c0_20 = arith.constant 0 : index
      %25 = vector.load %arg10[%24, %c0_19, %c0_20] : memref<1x128x128xbf16, #tpu.memory_space<vmem>>, vector<1x128x128xbf16>
      %26 = vector.shape_cast %25 : vector<1x128x128xbf16> to vector<128x128xbf16>
      %27 = vector.shape_cast %23 : vector<128x128xbf16> to vector<1x128x128xbf16>
      tpu.vector_store %arg10[%24, %c0_19, %c0_20], %27 {strides = array<i32>} : memref<1x128x128xbf16, #tpu.memory_space<vmem>>, vector<1x128x128xbf16>,
    } else {
    }
    %c0_i32_1 = arith.constant 0 : i32
    %3 = arith.cmpi eq, %arg1, %c0_i32_1 : i32
    %4 = arith.extui %3 : i1 to i32
    %c0_i32_2 = arith.constant 0 : i32
    %5 = arith.cmpi ne, %4, %c0_i32_2 : i32
    scf.if %5 {
      %cst_12 = arith.constant 0.000000e+00 : f32
      %17 = vector.broadcast %cst_12 : f32 to vector<16x128xf32>
      %c0_13 = arith.constant 0 : index
      %c0_14 = arith.constant 0 : index
      %18 = vector.load %arg9[%c0_13, %c0_14] : memref<16x128xf32, #tpu.memory_space<vmem>>, vector<16x128xf32>
      tpu.vector_store %arg9[%c0_13, %c0_14], %17 {strides = array<i32>} : memref<16x128xf32, #tpu.memory_space<vmem>>, vector<16x128xf32>,
    } else {
    }
    %c0 = arith.constant 0 : index
    %c0_3 = arith.constant 0 : index
    %6 = vector.load %arg9[%c0, %c0_3] : memref<16x128xf32, #tpu.memory_space<vmem>>, vector<16x128xf32>
    %c0_4 = arith.constant 0 : index
    %c0_5 = arith.constant 0 : index
    %7 = vector.load %arg2[%c0_4, %c0_5] : memref<16x128xbf16, #tpu.memory_space<vmem>>, vector<16x128xbf16>
    %8 = arith.index_cast %arg1 : i32 to index
    %c0_6 = arith.constant 0 : index
    %c0_7 = arith.constant 0 : index
    %9 = vector.load %arg10[%8, %c0_6, %c0_7] : memref<1x128x128xbf16, #tpu.memory_space<vmem>>, vector<1x128x128xbf16>
    %10 = vector.shape_cast %9 : vector<1x128x128xbf16> to vector<128x128xbf16>
    %cst = arith.constant dense<0.000000e+00> : vector<16x128xf32>
    %11 = tpu.matmul %7, %10, %cst {dimension_numbers = #tpu.dot_dimension_numbers<[1], [0], [0], [1], [0, 0, 1, 1], [], []>} : vector<16x128xbf16>, vector<128x128xbf16>, vector<16x128xf32> -> vector<16x128xf32>
    %12 = arith.addf %6, %11 : vector<16x128xf32>
    %c0_8 = arith.constant 0 : index
    %c0_9 = arith.constant 0 : index
    %13 = vector.load %arg9[%c0_8, %c0_9] : memref<16x128xf32, #tpu.memory_space<vmem>>, vector<16x128xf32>
    tpu.vector_store %arg9[%c0_8, %c0_9], %12 {strides = array<i32>} : memref<16x128xf32, #tpu.memory_space<vmem>>, vector<16x128xf32>,
    %c0_i32_10 = arith.constant 0 : i32
    %14 = arith.cmpi eq, %arg1, %c0_i32_10 : i32
    %15 = arith.extui %14 : i1 to i32
    %c0_i32_11 = arith.constant 0 : i32
    %16 = arith.cmpi ne, %15, %c0_i32_11 : i32
    scf.if %16 {
      %c0_12 = arith.constant 0 : index
      %c0_13 = arith.constant 0 : index
      %17 = vector.load %arg9[%c0_12, %c0_13] : memref<16x128xf32, #tpu.memory_space<vmem>>, vector<16x128xf32>
      %c0_14 = arith.constant 0 : index
      %c0_15 = arith.constant 0 : index
      %18 = vector.load %arg6[%c0_14, %c0_15] : memref<16x1xf32, #tpu.memory_space<vmem>>, vector<16x1xf32>
      %19 = vector.broadcast %18 : vector<16x1xf32> to vector<16x128xf32>
      %20 = arith.mulf %17, %19 : vector<16x128xf32>
      %c0_16 = arith.constant 0 : index
      %c0_17 = arith.constant 0 : index
      %21 = vector.load %arg7[%c0_16, %c0_17] : memref<1x128xf32, #tpu.memory_space<vmem>>, vector<1x128xf32>
      %22 = vector.broadcast %21 : vector<1x128xf32> to vector<16x128xf32>
      %23 = arith.addf %20, %22 : vector<16x128xf32>
      %cst_18 = arith.constant 0.000000e+00 : f32
      %24 = vector.broadcast %cst_18 : f32 to vector<16x128xf32>
      %25 = arith.maximumf %23, %24 : vector<16x128xf32>
      %26 = arith.truncf %25 : vector<16x128xf32> to vector<16x128xbf16>
      %c0_19 = arith.constant 0 : index
      %c0_20 = arith.constant 0 : index
      %27 = vector.load %arg8[%c0_19, %c0_20] : memref<16x128xbf16, #tpu.memory_space<vmem>>, vector<16x128xbf16>
      tpu.vector_store %arg8[%c0_19, %c0_20], %26 {strides = array<i32>} : memref<16x128xbf16, #tpu.memory_space<vmem>>, vector<16x128xbf16>,
    } else {
    }
    return
  }
  func.func @transform_0(%arg0: i32, %arg1: i32) -> (i32, i32) {
    %c0_i32 = arith.constant 0 : i32
    return %arg0, %arg1 : i32, i32
  }
  func.func @transform_1(%arg0: i32, %arg1: i32) -> (i32, i32) {
    %c0_i32 = arith.constant 0 : i32
    %c0_i32_0 = arith.constant 0 : i32
    return %arg1, %c0_i32 : i32, i32
  }
  func.func @transform_2(%arg0: i32, %arg1: i32) -> (i32, i32) {
    %c0_i32 = arith.constant 0 : i32
    %c0_i32_0 = arith.constant 0 : i32
    return %arg1, %c0_i32 : i32, i32
  }
  func.func @transform_3(%arg0: i32, %arg1: i32) -> (i32, i32) {
    %c0_i32 = arith.constant 0 : i32
    %c0_i32_0 = arith.constant 0 : i32
    %c0_i32_1 = arith.constant 0 : i32
    return %c0_i32, %c0_i32_0 : i32, i32
  }
  func.func @transform_4(%arg0: i32, %arg1: i32) -> (i32, i32) {
    %c0_i32 = arith.constant 0 : i32
    %c0_i32_0 = arith.constant 0 : i32
    return %arg0, %c0_i32 : i32, i32
  }
  func.func @transform_5(%arg0: i32, %arg1: i32) -> (i32, i32) {
    %c0_i32 = arith.constant 0 : i32
    %c0_i32_0 = arith.constant 0 : i32
    %c0_i32_1 = arith.constant 0 : i32
    return %c0_i32, %c0_i32_0 : i32, i32
  }
  func.func @transform_6(%arg0: i32, %arg1: i32) -> (i32, i32) {
    %c0_i32 = arith.constant 0 : i32
    %c0_i32_0 = arith.constant 0 : i32
    return %arg0, %c0_i32 : i32, i32
  }
}

module attributes {stable_mosaic.version = 11 : i64} {
  func.func @_fused_kernel(%arg0: i32, %arg1: i32, %arg2: memref<16x128xbf16, #tpu.memory_space<vmem>>, %arg3: memref<128x128xbf16, #tpu.memory_space<vmem>>, %arg4: memref<128x1xf32, #tpu.memory_space<vmem>>, %arg5: memref<128x128xbf16, #tpu.memory_space<vmem>>, %arg6: memref<16x1xf32, #tpu.memory_space<vmem>>, %arg7: memref<1x128xf32, #tpu.memory_space<vmem>>, %arg8: memref<16x128xbf16, #tpu.memory_space<vmem>>, %arg9: memref<16x128xf32, #tpu.memory_space<vmem>>, %arg10: memref<1x128x128xbf16, #tpu.memory_space<vmem>>) attributes {dimension_semantics = [#tpu.dimension_semantics<arbitrary>, #tpu.dimension_semantics<arbitrary>], iteration_bounds = array<i64: 1, 1>, scalar_prefetch = 0 : i64, scratch_operands = 2 : i64, tpu.core_type = #tpu.core_type<tc>, window_params = [{transform_indices = @transform_0, window_bounds = array<i64: 16, 128>}, {transform_indices = @transform_1, window_bounds = array<i64: 128, 128>}, {transform_indices = @transform_2, window_bounds = array<i64: 128, 1>}, {pipeline_mode = #tpu.pipeline_mode<synchronous>, transform_indices = @transform_3, window_bounds = array<i64: 128, 128>}, {transform_indices = @transform_4, window_bounds = array<i64: 16, 1>}, {pipeline_mode = #tpu.pipeline_mode<synchronous>, transform_indices = @transform_5, window_bounds = array<i64: 1, 128>}, {transform_indices = @transform_6, window_bounds = array<i64: 16, 128>}]} {
    %c0_i32 = arith.constant 0 : i32
    %0 = arith.cmpi eq, %arg0, %c0_i32 : i32
    %1 = arith.extui %0 : i1 to i32
    %c0_i32_0 = arith.constant 0 : i32
    %2 = arith.cmpi ne, %1, %c0_i32_0 : i32
    scf.if %2 {
      %c0_12 = arith.constant 0 : index
      %c0_13 = arith.constant 0 : index
      %17 = vector.load %arg3[%c0_12, %c0_13] : memref<128x128xbf16, #tpu.memory_space<vmem>>, vector<128x128xbf16>
      %c0_14 = arith.constant 0 : index
      %c0_15 = arith.constant 0 : index
      %18 = vector.load %arg5[%c0_14, %c0_15] : memref<128x128xbf16, #tpu.memory_space<vmem>>, vector<128x128xbf16>
      %cst_16 = arith.constant dense<0.000000e+00> : vector<128x128xf32>
      %19 = tpu.matmul %17, %18, %cst_16 {dimension_numbers = #tpu.dot_dimension_numbers<[1], [0], [0], [1], [0, 0, 1, 1], [], []>} : vector<128x128xbf16>, vector<128x128xbf16>, vector<128x128xf32> -> vector<128x128xf32>
      %c0_17 = arith.constant 0 : index
      %c0_18 = arith.constant 0 : index
      %20 = vector.load %arg4[%c0_17, %c0_18] : memref<128x1xf32, #tpu.memory_space<vmem>>, vector<128x1xf32>
      %21 = vector.broadcast %20 : vector<128x1xf32> to vector<128x128xf32>
      %22 = arith.mulf %19, %21 : vector<128x128xf32>
      %23 = arith.truncf %22 : vector<128x128xf32> to vector<128x128xbf16>
      %24 = arith.index_cast %arg1 : i32 to index
      %c0_19 = arith.constant 0 : index
      %c0_20 = arith.constant 0 : index
      %25 = vector.load %arg10[%24, %c0_19, %c0_20] : memref<1x128x128xbf16, #tpu.memory_space<vmem>>, vector<1x128x128xbf16>
      %26 = vector.shape_cast %25 : vector<1x128x128xbf16> to vector<128x128xbf16>
      %27 = vector.shape_cast %23 : vector<128x128xbf16> to vector<1x128x128xbf16>
      tpu.vector_store %arg10[%24, %c0_19, %c0_20], %27 {strides = array<i32>} : memref<1x128x128xbf16, #tpu.memory_space<vmem>>, vector<1x128x128xbf16>,
    } else {
    }
    %c0_i32_1 = arith.constant 0 : i32
    %3 = arith.cmpi eq, %arg1, %c0_i32_1 : i32
    %4 = arith.extui %3 : i1 to i32
    %c0_i32_2 = arith.constant 0 : i32
    %5 = arith.cmpi ne, %4, %c0_i32_2 : i32
    scf.if %5 {
      %cst_12 = arith.constant 0.000000e+00 : f32
      %17 = vector.broadcast %cst_12 : f32 to vector<16x128xf32>
      %c0_13 = arith.constant 0 : index
      %c0_14 = arith.constant 0 : index
      %18 = vector.load %arg9[%c0_13, %c0_14] : memref<16x128xf32, #tpu.memory_space<vmem>>, vector<16x128xf32>
      tpu.vector_store %arg9[%c0_13, %c0_14], %17 {strides = array<i32>} : memref<16x128xf32, #tpu.memory_space<vmem>>, vector<16x128xf32>,
    } else {
    }
    %c0 = arith.constant 0 : index
    %c0_3 = arith.constant 0 : index
    %6 = vector.load %arg9[%c0, %c0_3] : memref<16x128xf32, #tpu.memory_space<vmem>>, vector<16x128xf32>
    %c0_4 = arith.constant 0 : index
    %c0_5 = arith.constant 0 : index
    %7 = vector.load %arg2[%c0_4, %c0_5] : memref<16x128xbf16, #tpu.memory_space<vmem>>, vector<16x128xbf16>
    %8 = arith.index_cast %arg1 : i32 to index
    %c0_6 = arith.constant 0 : index
    %c0_7 = arith.constant 0 : index
    %9 = vector.load %arg10[%8, %c0_6, %c0_7] : memref<1x128x128xbf16, #tpu.memory_space<vmem>>, vector<1x128x128xbf16>
    %10 = vector.shape_cast %9 : vector<1x128x128xbf16> to vector<128x128xbf16>
    %cst = arith.constant dense<0.000000e+00> : vector<16x128xf32>
    %11 = tpu.matmul %7, %10, %cst {dimension_numbers = #tpu.dot_dimension_numbers<[1], [0], [0], [1], [0, 0, 1, 1], [], []>} : vector<16x128xbf16>, vector<128x128xbf16>, vector<16x128xf32> -> vector<16x128xf32>
    %12 = arith.addf %6, %11 : vector<16x128xf32>
    %c0_8 = arith.constant 0 : index
    %c0_9 = arith.constant 0 : index
    %13 = vector.load %arg9[%c0_8, %c0_9] : memref<16x128xf32, #tpu.memory_space<vmem>>, vector<16x128xf32>
    tpu.vector_store %arg9[%c0_8, %c0_9], %12 {strides = array<i32>} : memref<16x128xf32, #tpu.memory_space<vmem>>, vector<16x128xf32>,
    %c0_i32_10 = arith.constant 0 : i32
    %14 = arith.cmpi eq, %arg1, %c0_i32_10 : i32
    %15 = arith.extui %14 : i1 to i32
    %c0_i32_11 = arith.constant 0 : i32
    %16 = arith.cmpi ne, %15, %c0_i32_11 : i32
    scf.if %16 {
      %c0_12 = arith.constant 0 : index
      %c0_13 = arith.constant 0 : index
      %17 = vector.load %arg9[%c0_12, %c0_13] : memref<16x128xf32, #tpu.memory_space<vmem>>, vector<16x128xf32>
      %c0_14 = arith.constant 0 : index
      %c0_15 = arith.constant 0 : index
      %18 = vector.load %arg6[%c0_14, %c0_15] : memref<16x1xf32, #tpu.memory_space<vmem>>, vector<16x1xf32>
      %19 = vector.broadcast %18 : vector<16x1xf32> to vector<16x128xf32>
      %20 = arith.mulf %17, %19 : vector<16x128xf32>
      %c0_16 = arith.constant 0 : index
      %c0_17 = arith.constant 0 : index
      %21 = vector.load %arg7[%c0_16, %c0_17] : memref<1x128xf32, #tpu.memory_space<vmem>>, vector<1x128xf32>
      %22 = vector.broadcast %21 : vector<1x128xf32> to vector<16x128xf32>
      %23 = arith.addf %20, %22 : vector<16x128xf32>
      %cst_18 = arith.constant 0.000000e+00 : f32
      %24 = vector.broadcast %cst_18 : f32 to vector<16x128xf32>
      %25 = arith.maximumf %23, %24 : vector<16x128xf32>
      %26 = arith.truncf %25 : vector<16x128xf32> to vector<16x128xbf16>
      %c0_19 = arith.constant 0 : index
      %c0_20 = arith.constant 0 : index
      %27 = vector.load %arg8[%c0_19, %c0_20] : memref<16x128xbf16, #tpu.memory_space<vmem>>, vector<16x128xbf16>
      tpu.vector_store %arg8[%c0_19, %c0_20], %26 {strides = array<i32>} : memref<16x128xbf16, #tpu.memory_space<vmem>>, vector<16x128xbf16>,
    } else {
    }
    return
  }
  func.func @transform_0(%arg0: i32, %arg1: i32) -> (i32, i32) {
    %c0_i32 = arith.constant 0 : i32
    return %arg0, %arg1 : i32, i32
  }
  func.func @transform_1(%arg0: i32, %arg1: i32) -> (i32, i32) {
    %c0_i32 = arith.constant 0 : i32
    %c0_i32_0 = arith.constant 0 : i32
    return %arg1, %c0_i32 : i32, i32
  }
  func.func @transform_2(%arg0: i32, %arg1: i32) -> (i32, i32) {
    %c0_i32 = arith.constant 0 : i32
    %c0_i32_0 = arith.constant 0 : i32
    return %arg1, %c0_i32 : i32, i32
  }
  func.func @transform_3(%arg0: i32, %arg1: i32) -> (i32, i32) {
    %c0_i32 = arith.constant 0 : i32
    %c0_i32_0 = arith.constant 0 : i32
    %c0_i32_1 = arith.constant 0 : i32
    return %c0_i32, %c0_i32_0 : i32, i32
  }
  func.func @transform_4(%arg0: i32, %arg1: i32) -> (i32, i32) {
    %c0_i32 = arith.constant 0 : i32
    %c0_i32_0 = arith.constant 0 : i32
    return %arg0, %c0_i32 : i32, i32
  }
  func.func @transform_5(%arg0: i32, %arg1: i32) -> (i32, i32) {
    %c0_i32 = arith.constant 0 : i32
    %c0_i32_0 = arith.constant 0 : i32
    %c0_i32_1 = arith.constant 0 : i32
    return %c0_i32, %c0_i32_0 : i32, i32
  }
  func.func @transform_6(%arg0: i32, %arg1: i32) -> (i32, i32) {
    %c0_i32 = arith.constant 0 : i32
    %c0_i32_0 = arith.constant 0 : i32
    return %arg0, %c0_i32 : i32, i32
  }
}

module attributes {stable_mosaic.version = 11 : i64} {
  func.func @_fused_kernel(%arg0: i32, %arg1: i32, %arg2: memref<16x128xbf16, #tpu.memory_space<vmem>>, %arg3: memref<128x128xbf16, #tpu.memory_space<vmem>>, %arg4: memref<128x1xf32, #tpu.memory_space<vmem>>, %arg5: memref<128x128xbf16, #tpu.memory_space<vmem>>, %arg6: memref<16x1xf32, #tpu.memory_space<vmem>>, %arg7: memref<1x128xf32, #tpu.memory_space<vmem>>, %arg8: memref<16x128xbf16, #tpu.memory_space<vmem>>, %arg9: memref<16x128xf32, #tpu.memory_space<vmem>>, %arg10: memref<1x128x128xbf16, #tpu.memory_space<vmem>>) attributes {dimension_semantics = [#tpu.dimension_semantics<arbitrary>, #tpu.dimension_semantics<arbitrary>], iteration_bounds = array<i64: 1, 1>, scalar_prefetch = 0 : i64, scratch_operands = 2 : i64, tpu.core_type = #tpu.core_type<tc>, window_params = [{transform_indices = @transform_0, window_bounds = array<i64: 16, 128>}, {transform_indices = @transform_1, window_bounds = array<i64: 128, 128>}, {transform_indices = @transform_2, window_bounds = array<i64: 128, 1>}, {pipeline_mode = #tpu.pipeline_mode<synchronous>, transform_indices = @transform_3, window_bounds = array<i64: 128, 128>}, {transform_indices = @transform_4, window_bounds = array<i64: 16, 1>}, {pipeline_mode = #tpu.pipeline_mode<synchronous>, transform_indices = @transform_5, window_bounds = array<i64: 1, 128>}, {transform_indices = @transform_6, window_bounds = array<i64: 16, 128>}]} {
    %c0_i32 = arith.constant 0 : i32
    %0 = arith.cmpi eq, %arg0, %c0_i32 : i32
    %1 = arith.extui %0 : i1 to i32
    %c0_i32_0 = arith.constant 0 : i32
    %2 = arith.cmpi ne, %1, %c0_i32_0 : i32
    scf.if %2 {
      %c0_12 = arith.constant 0 : index
      %c0_13 = arith.constant 0 : index
      %17 = vector.load %arg3[%c0_12, %c0_13] : memref<128x128xbf16, #tpu.memory_space<vmem>>, vector<128x128xbf16>
      %c0_14 = arith.constant 0 : index
      %c0_15 = arith.constant 0 : index
      %18 = vector.load %arg5[%c0_14, %c0_15] : memref<128x128xbf16, #tpu.memory_space<vmem>>, vector<128x128xbf16>
      %cst_16 = arith.constant dense<0.000000e+00> : vector<128x128xf32>
      %19 = tpu.matmul %17, %18, %cst_16 {dimension_numbers = #tpu.dot_dimension_numbers<[1], [0], [0], [1], [0, 0, 1, 1], [], []>} : vector<128x128xbf16>, vector<128x128xbf16>, vector<128x128xf32> -> vector<128x128xf32>
      %c0_17 = arith.constant 0 : index
      %c0_18 = arith.constant 0 : index
      %20 = vector.load %arg4[%c0_17, %c0_18] : memref<128x1xf32, #tpu.memory_space<vmem>>, vector<128x1xf32>
      %21 = vector.broadcast %20 : vector<128x1xf32> to vector<128x128xf32>
      %22 = arith.mulf %19, %21 : vector<128x128xf32>
      %23 = arith.truncf %22 : vector<128x128xf32> to vector<128x128xbf16>
      %24 = arith.index_cast %arg1 : i32 to index
      %c0_19 = arith.constant 0 : index
      %c0_20 = arith.constant 0 : index
      %25 = vector.load %arg10[%24, %c0_19, %c0_20] : memref<1x128x128xbf16, #tpu.memory_space<vmem>>, vector<1x128x128xbf16>
      %26 = vector.shape_cast %25 : vector<1x128x128xbf16> to vector<128x128xbf16>
      %27 = vector.shape_cast %23 : vector<128x128xbf16> to vector<1x128x128xbf16>
      tpu.vector_store %arg10[%24, %c0_19, %c0_20], %27 {strides = array<i32>} : memref<1x128x128xbf16, #tpu.memory_space<vmem>>, vector<1x128x128xbf16>,
    } else {
    }
    %c0_i32_1 = arith.constant 0 : i32
    %3 = arith.cmpi eq, %arg1, %c0_i32_1 : i32
    %4 = arith.extui %3 : i1 to i32
    %c0_i32_2 = arith.constant 0 : i32
    %5 = arith.cmpi ne, %4, %c0_i32_2 : i32
    scf.if %5 {
      %cst_12 = arith.constant 0.000000e+00 : f32
      %17 = vector.broadcast %cst_12 : f32 to vector<16x128xf32>
      %c0_13 = arith.constant 0 : index
      %c0_14 = arith.constant 0 : index
      %18 = vector.load %arg9[%c0_13, %c0_14] : memref<16x128xf32, #tpu.memory_space<vmem>>, vector<16x128xf32>
      tpu.vector_store %arg9[%c0_13, %c0_14], %17 {strides = array<i32>} : memref<16x128xf32, #tpu.memory_space<vmem>>, vector<16x128xf32>,
    } else {
    }
    %c0 = arith.constant 0 : index
    %c0_3 = arith.constant 0 : index
    %6 = vector.load %arg9[%c0, %c0_3] : memref<16x128xf32, #tpu.memory_space<vmem>>, vector<16x128xf32>
    %c0_4 = arith.constant 0 : index
    %c0_5 = arith.constant 0 : index
    %7 = vector.load %arg2[%c0_4, %c0_5] : memref<16x128xbf16, #tpu.memory_space<vmem>>, vector<16x128xbf16>
    %8 = arith.index_cast %arg1 : i32 to index
    %c0_6 = arith.constant 0 : index
    %c0_7 = arith.constant 0 : index
    %9 = vector.load %arg10[%8, %c0_6, %c0_7] : memref<1x128x128xbf16, #tpu.memory_space<vmem>>, vector<1x128x128xbf16>
    %10 = vector.shape_cast %9 : vector<1x128x128xbf16> to vector<128x128xbf16>
    %cst = arith.constant dense<0.000000e+00> : vector<16x128xf32>
    %11 = tpu.matmul %7, %10, %cst {dimension_numbers = #tpu.dot_dimension_numbers<[1], [0], [0], [1], [0, 0, 1, 1], [], []>} : vector<16x128xbf16>, vector<128x128xbf16>, vector<16x128xf32> -> vector<16x128xf32>
    %12 = arith.addf %6, %11 : vector<16x128xf32>
    %c0_8 = arith.constant 0 : index
    %c0_9 = arith.constant 0 : index
    %13 = vector.load %arg9[%c0_8, %c0_9] : memref<16x128xf32, #tpu.memory_space<vmem>>, vector<16x128xf32>
    tpu.vector_store %arg9[%c0_8, %c0_9], %12 {strides = array<i32>} : memref<16x128xf32, #tpu.memory_space<vmem>>, vector<16x128xf32>,
    %c0_i32_10 = arith.constant 0 : i32
    %14 = arith.cmpi eq, %arg1, %c0_i32_10 : i32
    %15 = arith.extui %14 : i1 to i32
    %c0_i32_11 = arith.constant 0 : i32
    %16 = arith.cmpi ne, %15, %c0_i32_11 : i32
    scf.if %16 {
      %c0_12 = arith.constant 0 : index
      %c0_13 = arith.constant 0 : index
      %17 = vector.load %arg9[%c0_12, %c0_13] : memref<16x128xf32, #tpu.memory_space<vmem>>, vector<16x128xf32>
      %c0_14 = arith.constant 0 : index
      %c0_15 = arith.constant 0 : index
      %18 = vector.load %arg6[%c0_14, %c0_15] : memref<16x1xf32, #tpu.memory_space<vmem>>, vector<16x1xf32>
      %19 = vector.broadcast %18 : vector<16x1xf32> to vector<16x128xf32>
      %20 = arith.mulf %17, %19 : vector<16x128xf32>
      %c0_16 = arith.constant 0 : index
      %c0_17 = arith.constant 0 : index
      %21 = vector.load %arg7[%c0_16, %c0_17] : memref<1x128xf32, #tpu.memory_space<vmem>>, vector<1x128xf32>
      %22 = vector.broadcast %21 : vector<1x128xf32> to vector<16x128xf32>
      %23 = arith.addf %20, %22 : vector<16x128xf32>
      %24 = arith.truncf %23 : vector<16x128xf32> to vector<16x128xbf16>
      %c0_18 = arith.constant 0 : index
      %c0_19 = arith.constant 0 : index
      %25 = vector.load %arg8[%c0_18, %c0_19] : memref<16x128xbf16, #tpu.memory_space<vmem>>, vector<16x128xbf16>
      tpu.vector_store %arg8[%c0_18, %c0_19], %24 {strides = array<i32>} : memref<16x128xbf16, #tpu.memory_space<vmem>>, vector<16x128xbf16>,
    } else {
    }
    return
  }
  func.func @transform_0(%arg0: i32, %arg1: i32) -> (i32, i32) {
    %c0_i32 = arith.constant 0 : i32
    return %arg0, %arg1 : i32, i32
  }
  func.func @transform_1(%arg0: i32, %arg1: i32) -> (i32, i32) {
    %c0_i32 = arith.constant 0 : i32
    %c0_i32_0 = arith.constant 0 : i32
    return %arg1, %c0_i32 : i32, i32
  }
  func.func @transform_2(%arg0: i32, %arg1: i32) -> (i32, i32) {
    %c0_i32 = arith.constant 0 : i32
    %c0_i32_0 = arith.constant 0 : i32
    return %arg1, %c0_i32 : i32, i32
  }
  func.func @transform_3(%arg0: i32, %arg1: i32) -> (i32, i32) {
    %c0_i32 = arith.constant 0 : i32
    %c0_i32_0 = arith.constant 0 : i32
    %c0_i32_1 = arith.constant 0 : i32
    return %c0_i32, %c0_i32_0 : i32, i32
  }
  func.func @transform_4(%arg0: i32, %arg1: i32) -> (i32, i32) {
    %c0_i32 = arith.constant 0 : i32
    %c0_i32_0 = arith.constant 0 : i32
    return %arg0, %c0_i32 : i32, i32
  }
  func.func @transform_5(%arg0: i32, %arg1: i32) -> (i32, i32) {
    %c0_i32 = arith.constant 0 : i32
    %c0_i32_0 = arith.constant 0 : i32
    %c0_i32_1 = arith.constant 0 : i32
    return %c0_i32, %c0_i32_0 : i32, i32
  }
  func.func @transform_6(%arg0: i32, %arg1: i32) -> (i32, i32) {
    %c0_i32 = arith.constant 0 : i32
    %c0_i32_0 = arith.constant 0 : i32
    return %arg0, %c0_i32 : i32, i32
  }
}

</mosaic_0001>

<llo_original>
// kernel: gcn_forward.4
$region0: #{gcn_forward.4}
  #allocation0 [shape = 'u32[]', space=smem, size = 0x4, offset = 0x4, fixed_abs, tag = 'smem constant byte address 0x4 - core index']
  #allocation1 [shape = 'u32[144,128]{1,0:T(1,128)}', space=vmem, size = 0x12000, scoped, tag = 'internal scratch']
  #allocation2 [shape = 'f32[16,128]{1,0:T(8,128)}', space=vmem, size = 0x2000, scoped, tag = 'scratch operand']
  #allocation3 [shape = 'bf16[1,128,128]{2,1,0:T(8,128)(2,1)}', space=vmem, size = 0x8000, scoped, tag = 'scratch operand']
  %s0 = inlined_call_operand.vmem [shape: bf16[16,128], index: 0, kind: input, shape index: {}]
  %s1 = inlined_call_operand.vmem [shape: bf16[128,128], index: 1, kind: input, shape index: {}]
  %s2 = inlined_call_operand.vmem [shape: f32[128,1], index: 2, kind: input, shape index: {}]
  %s3 = inlined_call_operand.vmem [shape: bf16[128,128], index: 3, kind: input, shape index: {}]
  %s4 = inlined_call_operand.vmem [shape: f32[16,1], index: 4, kind: input, shape index: {}]
  %s5 = inlined_call_operand.vmem [shape: f32[1,128], index: 5, kind: input, shape index: {}]
  %s6 = inlined_call_operand.vmem [shape: bf16[16,128], index: 6, kind: output, shape index: {}]
  %s7 = sld [smem:[#allocation0]]
  $region46: #{gcn_forward.4} parent=0
    _
  %s9 = ssub.s32 1, %s7
  %s10 = scalar_select 0, %s9, %s7
  // Predicated region
  $region2: #{gcn_forward.4} parent=0 // pred_check
    _
  $region3: #{gcn_forward.4} parent=0 // pred_check_branch
    %12 = sbr.rel (0) target = $region5
  $region4: #{gcn_forward.4} parent=0 // pred_region
    _
  $region5: #{gcn_forward.4} parent=0 // pred_fallthru
    _
  // Predicated region
  $region6: #{gcn_forward.4} parent=0 // pred_check
    _
  $region7: #{gcn_forward.4} parent=0 // pred_check_branch
    %14 = sbr.rel (0) target = $region9
  $region8: #{gcn_forward.4} parent=0 // pred_region
    _
  $region9: #{gcn_forward.4} parent=0 // pred_fallthru
    _
  // Predicated region
  $region10: #{gcn_forward.4} parent=0 // pred_check
    _
  $region11: #{gcn_forward.4} parent=0 // pred_check_branch
    %16 = sbr.rel (0) target = $region13
  $region12: #{gcn_forward.4} parent=0 // pred_region
    _
  $region13: #{gcn_forward.4} parent=0 // pred_fallthru
    _
  // Predicated region
  $region14: #{gcn_forward.4} parent=0 // pred_check
    _
  $region15: #{gcn_forward.4} parent=0 // pred_check_branch
    %18 = sbr.rel (0) target = $region17
  $region16: #{gcn_forward.4} parent=0 // pred_region
    _
  $region17: #{gcn_forward.4} parent=0 // pred_fallthru
    _
  // Predicated region
  $region18: #{gcn_forward.4} parent=0 // pred_check
    _
  $region19: #{gcn_forward.4} parent=0 // pred_check_branch
    %20 = sbr.rel (0) target = $region21
  $region20: #{gcn_forward.4} parent=0 // pred_region
    _
  $region21: #{gcn_forward.4} parent=0 // pred_fallthru
    _
  // Predicated region
  $region22: #{gcn_forward.4} parent=0 // pred_check
    _
  $region23: #{gcn_forward.4} parent=0 // pred_check_branch
    %22 = sbr.rel (0) target = $region25
  $region24: #{gcn_forward.4} parent=0 // pred_region
    _
  $region25: #{gcn_forward.4} parent=0 // pred_fallthru
    _
  %p24 = scmp.eq.s32.totalorder 0, 0
  // Predicated region
  $region26: #{gcn_forward.4} parent=0 // pred_check
    %p25 = pneg %p24
  $region27: #{gcn_forward.4} parent=0 // pred_check_branch
    %27 = sbr.rel (%p25) target = $region29
  $region28: #{gcn_forward.4} parent=0 // pred_region
    %v28 = vld [vmem:[%s1] sm:$0xf]
    %v29 = vld [vmem:[%s1 + $0x4] sm:$0xf]
    %v30 = vld [vmem:[%s1 + $0x8] sm:$0xf]
    %v31 = vld [vmem:[%s1 + $0xc] sm:$0xf]
    %v32 = vld [vmem:[%s1 + $0x10] sm:$0xf]
    %v33 = vld [vmem:[%s1 + $0x14] sm:$0xf]
    %v34 = vld [vmem:[%s1 + $0x18] sm:$0xf]
    %v35 = vld [vmem:[%s1 + $0x1c] sm:$0xf]
    %v36 = vld [vmem:[%s1 + $0x20] sm:$0xf]
    %v37 = vld [vmem:[%s1 + $0x24] sm:$0xf]
    %v38 = vld [vmem:[%s1 + $0x28] sm:$0xf]
    %v39 = vld [vmem:[%s1 + $0x2c] sm:$0xf]
    %v40 = vld [vmem:[%s1 + $0x30] sm:$0xf]
    %v41 = vld [vmem:[%s1 + $0x34] sm:$0xf]
    %v42 = vld [vmem:[%s1 + $0x38] sm:$0xf]
    %v43 = vld [vmem:[%s1 + $0x3c] sm:$0xf]
    %v44 = vld [vmem:[%s3] sm:$0xf]
    %v45 = vld [vmem:[%s3 + $0x4] sm:$0xf]
    %v46 = vld [vmem:[%s3 + $0x8] sm:$0xf]
    %v47 = vld [vmem:[%s3 + $0xc] sm:$0xf]
    %v48 = vld [vmem:[%s3 + $0x10] sm:$0xf]
    %v49 = vld [vmem:[%s3 + $0x14] sm:$0xf]
    %v50 = vld [vmem:[%s3 + $0x18] sm:$0xf]
    %v51 = vld [vmem:[%s3 + $0x1c] sm:$0xf]
    %v52 = vld [vmem:[%s3 + $0x20] sm:$0xf]
    %v53 = vld [vmem:[%s3 + $0x24] sm:$0xf]
    %v54 = vld [vmem:[%s3 + $0x28] sm:$0xf]
    %v55 = vld [vmem:[%s3 + $0x2c] sm:$0xf]
    %v56 = vld [vmem:[%s3 + $0x30] sm:$0xf]
    %v57 = vld [vmem:[%s3 + $0x34] sm:$0xf]
    %v58 = vld [vmem:[%s3 + $0x38] sm:$0xf]
    %v59 = vld [vmem:[%s3 + $0x3c] sm:$0xf]
    %v76 = vunpack.c.l.b16 %v28
    %v77 = vunpack.c.l.b16 %v29
    %v78 = vunpack.c.l.b16 %v30
    %v79 = vunpack.c.l.b16 %v31
    %v80 = vunpack.c.l.b16 %v32
    %v81 = vunpack.c.l.b16 %v33
    %v82 = vunpack.c.l.b16 %v34
    %v83 = vunpack.c.l.b16 %v35
    %v84 = vunpack.c.l.b16 %v36
    %v85 = vunpack.c.l.b16 %v37
    %v86 = vunpack.c.l.b16 %v38
    %v87 = vunpack.c.l.b16 %v39
    %v88 = vunpack.c.l.b16 %v40
    %v89 = vunpack.c.l.b16 %v41
    %v90 = vunpack.c.l.b16 %v42
    %v91 = vunpack.c.l.b16 %v43
    %v92 = vpack.c.b16 %v77, %v76
    %v93 = vpack.c.b16 %v79, %v78
    %v94 = vpack.c.b16 %v81, %v80
    %v95 = vpack.c.b16 %v83, %v82
    %v96 = vpack.c.b16 %v85, %v84
    %v97 = vpack.c.b16 %v87, %v86
    %v98 = vpack.c.b16 %v89, %v88
    %v99 = vpack.c.b16 %v91, %v90
    %v124 = vunpack.c.l.b16 %v44
    %v125 = vunpack.c.l.b16 %v45
    %v126 = vunpack.c.l.b16 %v46
    %v127 = vunpack.c.l.b16 %v47
    %v128 = vunpack.c.l.b16 %v48
    %v129 = vunpack.c.l.b16 %v49
    %v130 = vunpack.c.l.b16 %v50
    %v131 = vunpack.c.l.b16 %v51
    %v132 = vunpack.c.l.b16 %v52
    %v133 = vunpack.c.l.b16 %v53
    %v134 = vunpack.c.l.b16 %v54
    %v135 = vunpack.c.l.b16 %v55
    %v136 = vunpack.c.l.b16 %v56
    %v137 = vunpack.c.l.b16 %v57
    %v138 = vunpack.c.l.b16 %v58
    %v139 = vunpack.c.l.b16 %v59
    %v140 = vpack.c.b16 %v125, %v124
    %v141 = vpack.c.b16 %v127, %v126
    %v142 = vpack.c.b16 %v129, %v128
    %v143 = vpack.c.b16 %v131, %v130
    %v144 = vpack.c.b16 %v133, %v132
    %v145 = vpack.c.b16 %v135, %v134
    %v146 = vpack.c.b16 %v137, %v136
    %v147 = vpack.c.b16 %v139, %v138
    %156 = vmatprep.subr.bf16.mxu0 0
    %157 = vmatpush1.bf16.msra.mxu0 %v147
    %158 = vmatprep.subr.bf16.mxu0 0
    %159 = vmatpush1.bf16.msra.mxu0 %v146
    %160 = vmatprep.subr.bf16.mxu0 0
    %161 = vmatpush1.bf16.msra.mxu0 %v145
    %162 = vmatprep.subr.bf16.mxu0 0
    %163 = vmatpush1.bf16.msra.mxu0 %v144
    %164 = vmatprep.subr.bf16.mxu0 0
    %165 = vmatpush1.bf16.msra.mxu0 %v143
    %166 = vmatprep.subr.bf16.mxu0 0
    %167 = vmatpush1.bf16.msra.mxu0 %v142
    %168 = vmatprep.subr.bf16.mxu0 0
    %169 = vmatpush1.bf16.msra.mxu0 %v141
    %170 = vmatprep.subr.bf16.mxu0 0
    %171 = vmatpush1.bf16.msra.mxu0 %v140
    %172 = vmatprep.subr.bf16.mxu0 0
    %173 = vmatpush2.bf16.msra.mxu0 0
    %174 = vmatprep.subr.bf16.mxu0 0
    %175 = vmatpush2.bf16.msra.mxu0 0
    %176 = vmatprep.subr.bf16.mxu0 0
    %177 = vmatpush2.bf16.msra.mxu0 0
    %178 = vmatprep.subr.bf16.mxu0 0
    %179 = vmatpush2.bf16.msra.mxu0 0
    %180 = vmatprep.subr.bf16.mxu0 0
    %181 = vmatpush2.bf16.msra.mxu0 0
    %182 = vmatprep.subr.bf16.mxu0 0
    %183 = vmatpush2.bf16.msra.mxu0 0
    %184 = vmatprep.subr.bf16.mxu0 0
    %185 = vmatpush2.bf16.msra.mxu0 0
    %186 = vmatprep.subr.bf16.mxu0 0
    %187 = vmatpush2.bf16.msra.mxu0 0
    %188 = vmatprep.mubr.bf16.mxu0 0
    %189 = vmatmul.mubr.bf16.gmra.mxu0 %v92
    %v190 = vpop.f32.mrf.mxu0
    %v191 = vadd.f32 0.0, %v190
    %v192 = vpop.f32.mrf.mxu0
    %v193 = vpop.f32.mrf.mxu0
    %v194 = vadd.f32 0.0, %v193
    %v195 = vpop.f32.mrf.mxu0
    %196 = vmatprep.mubr.bf16.mxu0 0
    %197 = vmatmul.mubr.bf16.gmra.mxu0 %v93
    %v198 = vpop.f32.mrf.mxu0
    %v199 = vadd.f32 0.0, %v198
    %v200 = vpop.f32.mrf.mxu0
    %v201 = vpop.f32.mrf.mxu0
    %v202 = vadd.f32 0.0, %v201
    %v203 = vpop.f32.mrf.mxu0
    %204 = vmatprep.mubr.bf16.mxu0 0
    %205 = vmatmul.mubr.bf16.gmra.mxu0 %v94
    %v206 = vpop.f32.mrf.mxu0
    %v207 = vadd.f32 0.0, %v206
    %v208 = vpop.f32.mrf.mxu0
    %v209 = vpop.f32.mrf.mxu0
    %v210 = vadd.f32 0.0, %v209
    %v211 = vpop.f32.mrf.mxu0
    %212 = vmatprep.mubr.bf16.mxu0 0
    %213 = vmatmul.mubr.bf16.gmra.mxu0 %v95
    %v214 = vpop.f32.mrf.mxu0
    %v215 = vadd.f32 0.0, %v214
    %v216 = vpop.f32.mrf.mxu0
    %v217 = vpop.f32.mrf.mxu0
    %v218 = vadd.f32 0.0, %v217
    %v219 = vpop.f32.mrf.mxu0
    %220 = vmatprep.mubr.bf16.mxu0 0
    %221 = vmatmul.mubr.bf16.gmra.mxu0 %v96
    %v222 = vpop.f32.mrf.mxu0
    %v223 = vadd.f32 0.0, %v222
    %v224 = vpop.f32.mrf.mxu0
    %v225 = vpop.f32.mrf.mxu0
    %v226 = vadd.f32 0.0, %v225
    %v227 = vpop.f32.mrf.mxu0
    %228 = vmatprep.mubr.bf16.mxu0 0
    %229 = vmatmul.mubr.bf16.gmra.mxu0 %v97
    %v230 = vpop.f32.mrf.mxu0
    %v231 = vadd.f32 0.0, %v230
    %v232 = vpop.f32.mrf.mxu0
    %v233 = vpop.f32.mrf.mxu0
    %v234 = vadd.f32 0.0, %v233
    %v235 = vpop.f32.mrf.mxu0
    %236 = vmatprep.mubr.bf16.mxu0 0
    %237 = vmatmul.mubr.bf16.gmra.mxu0 %v98
    %v238 = vpop.f32.mrf.mxu0
    %v239 = vadd.f32 0.0, %v238
    %v240 = vpop.f32.mrf.mxu0
    %v241 = vpop.f32.mrf.mxu0
    %v242 = vadd.f32 0.0, %v241
    %v243 = vpop.f32.mrf.mxu0
    %244 = vmatprep.mubr.bf16.mxu0 0
    %245 = vmatmul.mubr.bf16.gmra.mxu0 %v99
    %v246 = vpop.f32.mrf.mxu0
    %v247 = vadd.f32 0.0, %v246
    %v248 = vpop.f32.mrf.mxu0
    %v249 = vpop.f32.mrf.mxu0
    %v250 = vadd.f32 0.0, %v249
    %v251 = vpop.f32.mrf.mxu0
    %252 = vdwg.mxu0
    %v253 = vld [vmem:[%s2] sm:$0xff]
    %v254 = vld [vmem:[%s2 + $0x8] sm:$0xff]
    %v255 = vld [vmem:[%s2 + $0x10] sm:$0xff]
    %v256 = vld [vmem:[%s2 + $0x18] sm:$0xff]
    %v257 = vld [vmem:[%s2 + $0x20] sm:$0xff]
    %v258 = vld [vmem:[%s2 + $0x28] sm:$0xff]
    %v259 = vld [vmem:[%s2 + $0x30] sm:$0xff]
    %v260 = vld [vmem:[%s2 + $0x38] sm:$0xff]
    %v261 = vld [vmem:[%s2 + $0x40] sm:$0xff]
    %v262 = vld [vmem:[%s2 + $0x48] sm:$0xff]
    %v263 = vld [vmem:[%s2 + $0x50] sm:$0xff]
    %v264 = vld [vmem:[%s2 + $0x58] sm:$0xff]
    %v265 = vld [vmem:[%s2 + $0x60] sm:$0xff]
    %v266 = vld [vmem:[%s2 + $0x68] sm:$0xff]
    %v267 = vld [vmem:[%s2 + $0x70] sm:$0xff]
    %v268 = vld [vmem:[%s2 + $0x78] sm:$0xff]
    %270 = vset.pattern.permute.xlu0 0
    %271 = vperm.xlu0 %270, %v253
    %v272 = vpop.permute.xlu0 %271
    %275 = vset.pattern.permute.xlu0 0
    %276 = vperm.xlu0 %275, %v254
    %v277 = vpop.permute.xlu0 %276
    %280 = vset.pattern.permute.xlu0 0
    %281 = vperm.xlu0 %280, %v255
    %v282 = vpop.permute.xlu0 %281
    %285 = vset.pattern.permute.xlu0 0
    %286 = vperm.xlu0 %285, %v256
    %v287 = vpop.permute.xlu0 %286
    %290 = vset.pattern.permute.xlu0 0
    %291 = vperm.xlu0 %290, %v257
    %v292 = vpop.permute.xlu0 %291
    %295 = vset.pattern.permute.xlu0 0
    %296 = vperm.xlu0 %295, %v258
    %v297 = vpop.permute.xlu0 %296
    %300 = vset.pattern.permute.xlu0 0
    %301 = vperm.xlu0 %300, %v259
    %v302 = vpop.permute.xlu0 %301
    %305 = vset.pattern.permute.xlu0 0
    %306 = vperm.xlu0 %305, %v260
    %v307 = vpop.permute.xlu0 %306
    %310 = vset.pattern.permute.xlu0 0
    %311 = vperm.xlu0 %310, %v261
    %v312 = vpop.permute.xlu0 %311
    %315 = vset.pattern.permute.xlu0 0
    %316 = vperm.xlu0 %315, %v262
    %v317 = vpop.permute.xlu0 %316
    %320 = vset.pattern.permute.xlu0 0
    %321 = vperm.xlu0 %320, %v263
    %v322 = vpop.permute.xlu0 %321
    %325 = vset.pattern.permute.xlu0 0
    %326 = vperm.xlu0 %325, %v264
    %v327 = vpop.permute.xlu0 %326
    %330 = vset.pattern.permute.xlu0 0
    %331 = vperm.xlu0 %330, %v265
    %v332 = vpop.permute.xlu0 %331
    %335 = vset.pattern.permute.xlu0 0
    %336 = vperm.xlu0 %335, %v266
    %v337 = vpop.permute.xlu0 %336
    %340 = vset.pattern.permute.xlu0 0
    %341 = vperm.xlu0 %340, %v267
    %v342 = vpop.permute.xlu0 %341
    %345 = vset.pattern.permute.xlu0 0
    %346 = vperm.xlu0 %345, %v268
    %v347 = vpop.permute.xlu0 %346
    %v349 = vmul.f32 %v191, %v272
    %v350 = vmul.f32 %v194, %v277
    %v351 = vmul.f32 %v199, %v282
    %v352 = vmul.f32 %v202, %v287
    %v353 = vmul.f32 %v207, %v292
    %v354 = vmul.f32 %v210, %v297
    %v355 = vmul.f32 %v215, %v302
    %v356 = vmul.f32 %v218, %v307
    %v357 = vmul.f32 %v223, %v312
    %v358 = vmul.f32 %v226, %v317
    %v359 = vmul.f32 %v231, %v322
    %v360 = vmul.f32 %v234, %v327
    %v361 = vmul.f32 %v239, %v332
    %v362 = vmul.f32 %v242, %v337
    %v363 = vmul.f32 %v247, %v342
    %v364 = vmul.f32 %v250, %v347
    %v365 = vpack.c.bf16 %v350, %v349
    %v366 = vpack.c.bf16 %v352, %v351
    %v367 = vpack.c.bf16 %v354, %v353
    %v368 = vpack.c.bf16 %v356, %v355
    %v369 = vpack.c.bf16 %v358, %v357
    %v370 = vpack.c.bf16 %v360, %v359
    %v371 = vpack.c.bf16 %v362, %v361
    %v372 = vpack.c.bf16 %v364, %v363
    %v381 = vunpack.c.l.b16 %v365
    %v382 = vunpack.c.h.b16 %v365
    %v383 = vunpack.c.l.b16 %v366
    %v384 = vunpack.c.h.b16 %v366
    %v385 = vunpack.c.l.b16 %v367
    %v386 = vunpack.c.h.b16 %v367
    %v387 = vunpack.c.l.b16 %v368
    %v388 = vunpack.c.h.b16 %v368
    %v389 = vunpack.c.l.b16 %v369
    %v390 = vunpack.c.h.b16 %v369
    %v391 = vunpack.c.l.b16 %v370
    %v392 = vunpack.c.h.b16 %v370
    %v393 = vunpack.c.l.b16 %v371
    %v394 = vunpack.c.h.b16 %v371
    %v395 = vunpack.c.l.b16 %v372
    %v396 = vunpack.c.h.b16 %v372
    %v397 = vpack.c.b16 %v381, %v381
    %v398 = vpack.c.b16 %v382, %v382
    %v399 = vpack.c.b16 %v383, %v383
    %v400 = vpack.c.b16 %v384, %v384
    %v401 = vpack.c.b16 %v385, %v385
    %v402 = vpack.c.b16 %v386, %v386
    %v403 = vpack.c.b16 %v387, %v387
    %v404 = vpack.c.b16 %v388, %v388
    %v405 = vpack.c.b16 %v389, %v389
    %v406 = vpack.c.b16 %v390, %v390
    %v407 = vpack.c.b16 %v391, %v391
    %v408 = vpack.c.b16 %v392, %v392
    %v409 = vpack.c.b16 %v393, %v393
    %v410 = vpack.c.b16 %v394, %v394
    %v411 = vpack.c.b16 %v395, %v395
    %v412 = vpack.c.b16 %v396, %v396
    %s429 = smul.u32 0, 16
    %s430 = smul.addr %s429, 4
    %s431 = scalar_lea.vmem [#allocation3], %s430
    %432 = vst [vmem:[%s431] sm:$0xf] %v397
    %433 = vst [vmem:[%s431 + $0x4] sm:$0xf] %v398
    %434 = vst [vmem:[%s431 + $0x8] sm:$0xf] %v399
    %435 = vst [vmem:[%s431 + $0xc] sm:$0xf] %v400
    %436 = vst [vmem:[%s431 + $0x10] sm:$0xf] %v401
    %437 = vst [vmem:[%s431 + $0x14] sm:$0xf] %v402
    %438 = vst [vmem:[%s431 + $0x18] sm:$0xf] %v403
    %439 = vst [vmem:[%s431 + $0x1c] sm:$0xf] %v404
    %440 = vst [vmem:[%s431 + $0x20] sm:$0xf] %v405
    %441 = vst [vmem:[%s431 + $0x24] sm:$0xf] %v406
    %442 = vst [vmem:[%s431 + $0x28] sm:$0xf] %v407
    %443 = vst [vmem:[%s431 + $0x2c] sm:$0xf] %v408
    %444 = vst [vmem:[%s431 + $0x30] sm:$0xf] %v409
    %445 = vst [vmem:[%s431 + $0x34] sm:$0xf] %v410
    %446 = vst [vmem:[%s431 + $0x38] sm:$0xf] %v411
    %447 = vst [vmem:[%s431 + $0x3c] sm:$0xf] %v412
  $region29: #{gcn_forward.4} parent=0 // pred_fallthru
    _
  %p448 = scmp.eq.s32.totalorder 0, 0
  // Predicated region
  $region30: #{gcn_forward.4} parent=0 // pred_check
    %p449 = pneg %p448
  $region31: #{gcn_forward.4} parent=0 // pred_check_branch
    %451 = sbr.rel (%p449) target = $region33
  $region32: #{gcn_forward.4} parent=0 // pred_region
    %452 = vst [vmem:[#allocation2] sm:$0xff] 0.0
    %453 = vst [vmem:[#allocation2 + $0x8] sm:$0xff] 0.0
  $region33: #{gcn_forward.4} parent=0 // pred_fallthru
    _
  %v454 = vld [vmem:[#allocation2] sm:$0xff]
  %v455 = vld [vmem:[#allocation2 + $0x8] sm:$0xff]
  %v456 = vld [vmem:[%s0] sm:$0xf]
  %v457 = vld [vmem:[%s0 + $0x4] sm:$0xf]
  %s458 = smul.u32 0, 16
  %s459 = smul.addr %s458, 4
  %s460 = scalar_lea.vmem [#allocation3], %s459
  %v461 = vld [vmem:[%s460] sm:$0xf]
  %v462 = vld [vmem:[%s460 + $0x4] sm:$0xf]
  %v463 = vld [vmem:[%s460 + $0x8] sm:$0xf]
  %v464 = vld [vmem:[%s460 + $0xc] sm:$0xf]
  %v465 = vld [vmem:[%s460 + $0x10] sm:$0xf]
  %v466 = vld [vmem:[%s460 + $0x14] sm:$0xf]
  %v467 = vld [vmem:[%s460 + $0x18] sm:$0xf]
  %v468 = vld [vmem:[%s460 + $0x1c] sm:$0xf]
  %v469 = vld [vmem:[%s460 + $0x20] sm:$0xf]
  %v470 = vld [vmem:[%s460 + $0x24] sm:$0xf]
  %v471 = vld [vmem:[%s460 + $0x28] sm:$0xf]
  %v472 = vld [vmem:[%s460 + $0x2c] sm:$0xf]
  %v473 = vld [vmem:[%s460 + $0x30] sm:$0xf]
  %v474 = vld [vmem:[%s460 + $0x34] sm:$0xf]
  %v475 = vld [vmem:[%s460 + $0x38] sm:$0xf]
  %v476 = vld [vmem:[%s460 + $0x3c] sm:$0xf]
  %v479 = vunpack.c.l.b16 %v456
  %v480 = vunpack.c.l.b16 %v457
  %v481 = vpack.c.b16 %v480, %v479
  %v499 = vunpack.c.l.b16 %v461
  %v500 = vunpack.c.l.b16 %v462
  %v501 = vunpack.c.l.b16 %v463
  %v502 = vunpack.c.l.b16 %v464
  %v503 = vunpack.c.l.b16 %v465
  %v504 = vunpack.c.l.b16 %v466
  %v505 = vunpack.c.l.b16 %v467
  %v506 = vunpack.c.l.b16 %v468
  %v507 = vunpack.c.l.b16 %v469
  %v508 = vunpack.c.l.b16 %v470
  %v509 = vunpack.c.l.b16 %v471
  %v510 = vunpack.c.l.b16 %v472
  %v511 = vunpack.c.l.b16 %v473
  %v512 = vunpack.c.l.b16 %v474
  %v513 = vunpack.c.l.b16 %v475
  %v514 = vunpack.c.l.b16 %v476
  %v515 = vpack.c.b16 %v500, %v499
  %v516 = vpack.c.b16 %v502, %v501
  %v517 = vpack.c.b16 %v504, %v503
  %v518 = vpack.c.b16 %v506, %v505
  %v519 = vpack.c.b16 %v508, %v507
  %v520 = vpack.c.b16 %v510, %v509
  %v521 = vpack.c.b16 %v512, %v511
  %v522 = vpack.c.b16 %v514, %v513
  %531 = vmatprep.subr.bf16.mxu0 0
  %532 = vmatpush1.bf16.msra.mxu0 %v522
  %533 = vmatprep.subr.bf16.mxu0 0
  %534 = vmatpush1.bf16.msra.mxu0 %v521
  %535 = vmatprep.subr.bf16.mxu0 0
  %536 = vmatpush1.bf16.msra.mxu0 %v520
  %537 = vmatprep.subr.bf16.mxu0 0
  %538 = vmatpush1.bf16.msra.mxu0 %v519
  %539 = vmatprep.subr.bf16.mxu0 0
  %540 = vmatpush1.bf16.msra.mxu0 %v518
  %541 = vmatprep.subr.bf16.mxu0 0
  %542 = vmatpush1.bf16.msra.mxu0 %v517
  %543 = vmatprep.subr.bf16.mxu0 0
  %544 = vmatpush1.bf16.msra.mxu0 %v516
  %545 = vmatprep.subr.bf16.mxu0 0
  %546 = vmatpush1.bf16.msra.mxu0 %v515
  %547 = vmatprep.subr.bf16.mxu0 0
  %548 = vmatpush2.bf16.msra.mxu0 0
  %549 = vmatprep.subr.bf16.mxu0 0
  %550 = vmatpush2.bf16.msra.mxu0 0
  %551 = vmatprep.subr.bf16.mxu0 0
  %552 = vmatpush2.bf16.msra.mxu0 0
  %553 = vmatprep.subr.bf16.mxu0 0
  %554 = vmatpush2.bf16.msra.mxu0 0
  %555 = vmatprep.subr.bf16.mxu0 0
  %556 = vmatpush2.bf16.msra.mxu0 0
  %557 = vmatprep.subr.bf16.mxu0 0
  %558 = vmatpush2.bf16.msra.mxu0 0
  %559 = vmatprep.subr.bf16.mxu0 0
  %560 = vmatpush2.bf16.msra.mxu0 0
  %561 = vmatprep.subr.bf16.mxu0 0
  %562 = vmatpush2.bf16.msra.mxu0 0
  %563 = vmatprep.mubr.bf16.mxu0 0
  %564 = vmatmul.mubr.bf16.gmra.mxu0 %v481
  %v565 = vpop.f32.mrf.mxu0
  %v566 = vadd.f32 0.0, %v565
  %v567 = vpop.f32.mrf.mxu0
  %v568 = vpop.f32.mrf.mxu0
  %v569 = vadd.f32 0.0, %v568
  %v570 = vpop.f32.mrf.mxu0
  %571 = vdwg.mxu0
  %v572 = vadd.f32 %v454, %v566
  %v573 = vadd.f32 %v455, %v569
  %574 = vst [vmem:[#allocation2] sm:$0xff] %v572
  %575 = vst [vmem:[#allocation2 + $0x8] sm:$0xff] %v573
  // Predicated region
  $region34: #{gcn_forward.4} parent=0 // pred_check
    %p576 = pneg %p448
  $region35: #{gcn_forward.4} parent=0 // pred_check_branch
    %578 = sbr.rel (%p576) target = $region37
  $region36: #{gcn_forward.4} parent=0 // pred_region
    %v579 = vld [vmem:[#allocation2] sm:$0xff]
    %v580 = vld [vmem:[#allocation2 + $0x8] sm:$0xff]
    %v581 = vld [vmem:[%s4] sm:$0xff]
    %v582 = vld [vmem:[%s4 + $0x8] sm:$0xff]
    %584 = vset.pattern.permute.xlu0 0
    %585 = vperm.xlu0 %584, %v581
    %v586 = vpop.permute.xlu0 %585
    %589 = vset.pattern.permute.xlu0 0
    %590 = vperm.xlu0 %589, %v582
    %v591 = vpop.permute.xlu0 %590
    %v593 = vmul.f32 %v579, %v586
    %v594 = vmul.f32 %v580, %v591
    %v595 = vld [vmem:[%s5] sm:$0x1]
    %v597 = vlaneseq
    %v598 = vshrl.u32 %v597, 7
    %v599 = vsub.s32 0, %v598
    %v600 = vrot.slane %v595, %v599
    %v602 = vadd.f32 %v593, %v600
    %v603 = vadd.f32 %v594, %v600
    %v604 = vmax.f32 %v602, 0.0
    %v605 = vmax.f32 %v603, 0.0
    %v606 = vpack.c.bf16 %v605, %v604
    %v608 = vunpack.c.l.b16 %v606
    %v609 = vunpack.c.h.b16 %v606
    %v610 = vpack.c.b16 %v608, %v608
    %v611 = vpack.c.b16 %v609, %v609
    %614 = vst [vmem:[%s6] sm:$0xf] %v610
    %615 = vst [vmem:[%s6 + $0x4] sm:$0xf] %v611
  $region37: #{gcn_forward.4} parent=0 // pred_fallthru
    _
  // Predicated region
  $region38: #{gcn_forward.4} parent=0 // pred_check
    _
  $region39: #{gcn_forward.4} parent=0 // pred_check_branch
    %617 = sbr.rel (0) target = $region41
  $region40: #{gcn_forward.4} parent=0 // pred_region
    _
  $region41: #{gcn_forward.4} parent=0 // pred_fallthru
    _
  // Predicated region
  $region42: #{gcn_forward.4} parent=0 // pred_check
    _
  $region43: #{gcn_forward.4} parent=0 // pred_check_branch
    %619 = sbr.rel (0) target = $region45
  $region44: #{gcn_forward.4} parent=0 // pred_region
    _
  $region45: #{gcn_forward.4} parent=0 // pred_fallthru
    _

// kernel: gcn_forward.3
$region0: #{gcn_forward.3}
  #allocation0 [shape = 'u32[]', space=smem, size = 0x4, offset = 0x4, fixed_abs, tag = 'smem constant byte address 0x4 - core index']
  #allocation1 [shape = 'u32[144,128]{1,0:T(1,128)}', space=vmem, size = 0x12000, scoped, tag = 'internal scratch']
  #allocation2 [shape = 'f32[16,128]{1,0:T(8,128)}', space=vmem, size = 0x2000, scoped, tag = 'scratch operand']
  #allocation3 [shape = 'bf16[1,128,128]{2,1,0:T(8,128)(2,1)}', space=vmem, size = 0x8000, scoped, tag = 'scratch operand']
  %s0 = inlined_call_operand.vmem [shape: bf16[32,128], index: 0, kind: input, shape index: {}]
  %s1 = inlined_call_operand.vmem [shape: bf16[128,128], index: 1, kind: input, shape index: {}]
  %s2 = inlined_call_operand.vmem [shape: f32[128,1], index: 2, kind: input, shape index: {}]
  %s3 = inlined_call_operand.vmem [shape: bf16[128,128], index: 3, kind: input, shape index: {}]
  %s4 = inlined_call_operand.vmem [shape: f32[32,1], index: 4, kind: input, shape index: {}]
  %s5 = inlined_call_operand.vmem [shape: f32[1,128], index: 5, kind: input, shape index: {}]
  %s6 = inlined_call_operand.vmem [shape: bf16[32,128], index: 6, kind: output, shape index: {}]
  %s7 = sld [smem:[#allocation0]]
  $region69: #{gcn_forward.3} parent=0
    _
  %s9 = ssub.s32 1, %s7
  %s10 = scalar_select 0, %s9, %s7
  loop: start=0, step=1, limit=4
  $region2: #{gcn_forward.3} parent=0 // loop_pre_header
    _
  $region3: #{gcn_forward.3} parent=0 // loop_header
    %s12 = sphi 0, %s16
    %p13 = scmp.ge.s32.totalorder %s12, 4
    %s19 = sphi 0, %s31
    %s20 = sphi 0, %s27
    %s21 = sphi 0, %s19
    %s22 = sphi 0, %s20
    %s23 = sphi 0, %s21
    %s24 = sphi 0, %s22
    %s36 = sphi 0, %s38
    %s39 = sphi 0, %s36
    %s40 = sphi 0, %s39
    %s56 = sphi 0, %s40
    %s62 = sphi 0, %s64
    %s65 = sphi 0, %s62
    %s66 = sphi 0, %s65
    %s82 = sphi 0, %s66
    %s88 = sphi 0, %s90
    %s91 = sphi 0, %s88
    %s92 = sphi 0, %s91
    %s108 = sphi 0, %s92
    %s112 = sphi 0, %s112
    %s114 = sphi 0, %s112
    %s115 = sphi 0, %s114
    %s129 = sphi 0, %s115
    %s135 = sphi 0, %s137
    %s138 = sphi 0, %s135
    %s139 = sphi 0, %s138
    %s155 = sphi 0, %s139
    %s159 = sphi 0, %s159
    %s161 = sphi 0, %s159
    %s162 = sphi 0, %s161
    %s176 = sphi 0, %s162
    %s182 = sphi 0, %s184
    %s185 = sphi 0, %s182
    %s186 = sphi 0, %s185
    %s202 = sphi 0, %s186
  $region4: #{gcn_forward.3} parent=0 // loop_header_branch
    %15 = sbr.rel (%p13) target = $region8
  $region5: #{gcn_forward.3} parent=0 // loop_body
    %s17 = ssub.s32 %s12, 1
    %s18 = ssub.s32 %s12, 2
    %s25 = sadd.s32 1, %s20
    %p26 = scmp.ge.s32.totalorder %s25, 1
    %s27 = scalar_select %p26, 0, %s25
    %s28 = sadd.s32 1, %s19
    %s29 = scalar_select %p26, %s28, %s19
    %p30 = scmp.ge.s32.totalorder %s29, 2
    %s31 = scalar_select %p30, 0, %s29
    %s32 = ssub.s32 %s19, %s31
    %s33 = ssub.s32 %s20, %s27
    %s34 = sor.u32 %s32, %s33
    %p35 = scmp.eq.s32.totalorder %s34, 0
    %s37 = sadd.s32 %s36, 1
    %s38 = scalar_select %p35, %s36, %s37
    %p41 = pneg %p35
    %p42 = scmp.eq.s32.totalorder %s12, 1
    %p43 = por %p41, %p42
    %p44 = scmp.ne.s32.totalorder %s36, %s39
    %p45 = scmp.eq.s32.totalorder %s12, 0
    %p46 = por %p44, %p45
    %p47 = scmp.ne.s32.totalorder %s36, %s39
    %p48 = scmp.eq.s32.totalorder %s17, 1
    %p49 = por %p47, %p48
    %p50 = scmp.ne.s32.totalorder %s39, %s40
    %p51 = scmp.eq.s32.totalorder %s17, 0
    %p52 = por %p50, %p51
    %p53 = scmp.ne.s32.totalorder %s39, %s40
    %p54 = scmp.eq.s32.totalorder %s18, 1
    %p55 = por %p53, %p54
    %p57 = scmp.ne.s32.totalorder %s40, %s56
    %p58 = scmp.eq.s32.totalorder %s18, 0
    %p59 = por %p57, %p58
    %s60 = ssub.s32 %s20, %s27
    %p61 = scmp.eq.s32.totalorder %s60, 0
    %s63 = sadd.s32 %s62, 1
    %s64 = scalar_select %p61, %s62, %s63
    %p67 = pneg %p61
    %p68 = scmp.eq.s32.totalorder %s12, 1
    %p69 = por %p67, %p68
    %p70 = scmp.ne.s32.totalorder %s62, %s65
    %p71 = scmp.eq.s32.totalorder %s12, 0
    %p72 = por %p70, %p71
    %p73 = scmp.ne.s32.totalorder %s62, %s65
    %p74 = scmp.eq.s32.totalorder %s17, 1
    %p75 = por %p73, %p74
    %p76 = scmp.ne.s32.totalorder %s65, %s66
    %p77 = scmp.eq.s32.totalorder %s17, 0
    %p78 = por %p76, %p77
    %p79 = scmp.ne.s32.totalorder %s65, %s66
    %p80 = scmp.eq.s32.totalorder %s18, 1
    %p81 = por %p79, %p80
    %p83 = scmp.ne.s32.totalorder %s66, %s82
    %p84 = scmp.eq.s32.totalorder %s18, 0
    %p85 = por %p83, %p84
    %s86 = ssub.s32 %s20, %s27
    %p87 = scmp.eq.s32.totalorder %s86, 0
    %s89 = sadd.s32 %s88, 1
    %s90 = scalar_select %p87, %s88, %s89
    %p93 = pneg %p87
    %p94 = scmp.eq.s32.totalorder %s12, 1
    %p95 = por %p93, %p94
    %p96 = scmp.ne.s32.totalorder %s88, %s91
    %p97 = scmp.eq.s32.totalorder %s12, 0
    %p98 = por %p96, %p97
    %p99 = scmp.ne.s32.totalorder %s88, %s91
    %p100 = scmp.eq.s32.totalorder %s17, 1
    %p101 = por %p99, %p100
    %p102 = scmp.ne.s32.totalorder %s91, %s92
    %p103 = scmp.eq.s32.totalorder %s17, 0
    %p104 = por %p102, %p103
    %p105 = scmp.ne.s32.totalorder %s91, %s92
    %p106 = scmp.eq.s32.totalorder %s18, 1
    %p107 = por %p105, %p106
    %p109 = scmp.ne.s32.totalorder %s92, %s108
    %p110 = scmp.eq.s32.totalorder %s18, 0
    %p111 = por %p109, %p110
    %s113 = sadd.s32 %s112, 1
    %p116 = scmp.eq.s32.totalorder %s12, 1
    %p117 = scmp.ne.s32.totalorder %s112, %s114
    %p118 = scmp.eq.s32.totalorder %s12, 0
    %p119 = por %p117, %p118
    %p120 = scmp.ne.s32.totalorder %s112, %s114
    %p121 = scmp.eq.s32.totalorder %s17, 1
    %p122 = por %p120, %p121
    %p123 = scmp.ne.s32.totalorder %s114, %s115
    %p124 = scmp.eq.s32.totalorder %s17, 0
    %p125 = por %p123, %p124
    %p126 = scmp.ne.s32.totalorder %s114, %s115
    %p127 = scmp.eq.s32.totalorder %s18, 1
    %p128 = por %p126, %p127
    %p130 = scmp.ne.s32.totalorder %s115, %s129
    %p131 = scmp.eq.s32.totalorder %s18, 0
    %p132 = por %p130, %p131
    %s133 = ssub.s32 %s19, %s31
    %p134 = scmp.eq.s32.totalorder %s133, 0
    %s136 = sadd.s32 %s135, 1
    %s137 = scalar_select %p134, %s135, %s136
    %p140 = pneg %p134
    %p141 = scmp.eq.s32.totalorder %s12, 1
    %p142 = por %p140, %p141
    %p143 = scmp.ne.s32.totalorder %s135, %s138
    %p144 = scmp.eq.s32.totalorder %s12, 0
    %p145 = por %p143, %p144
    %p146 = scmp.ne.s32.totalorder %s135, %s138
    %p147 = scmp.eq.s32.totalorder %s17, 1
    %p148 = por %p146, %p147
    %p149 = scmp.ne.s32.totalorder %s138, %s139
    %p150 = scmp.eq.s32.totalorder %s17, 0
    %p151 = por %p149, %p150
    %p152 = scmp.ne.s32.totalorder %s138, %s139
    %p153 = scmp.eq.s32.totalorder %s18, 1
    %p154 = por %p152, %p153
    %p156 = scmp.ne.s32.totalorder %s139, %s155
    %p157 = scmp.eq.s32.totalorder %s18, 0
    %p158 = por %p156, %p157
    %s160 = sadd.s32 %s159, 1
    %p163 = scmp.eq.s32.totalorder %s12, 1
    %p164 = scmp.ne.s32.totalorder %s159, %s161
    %p165 = scmp.eq.s32.totalorder %s12, 0
    %p166 = por %p164, %p165
    %p167 = scmp.ne.s32.totalorder %s159, %s161
    %p168 = scmp.eq.s32.totalorder %s17, 1
    %p169 = por %p167, %p168
    %p170 = scmp.ne.s32.totalorder %s161, %s162
    %p171 = scmp.eq.s32.totalorder %s17, 0
    %p172 = por %p170, %p171
    %p173 = scmp.ne.s32.totalorder %s161, %s162
    %p174 = scmp.eq.s32.totalorder %s18, 1
    %p175 = por %p173, %p174
    %p177 = scmp.ne.s32.totalorder %s162, %s176
    %p178 = scmp.eq.s32.totalorder %s18, 0
    %p179 = por %p177, %p178
    %s180 = ssub.s32 %s19, %s31
    %p181 = scmp.eq.s32.totalorder %s180, 0
    %s183 = sadd.s32 %s182, 1
    %s184 = scalar_select %p181, %s182, %s183
    %p187 = pneg %p181
    %p188 = scmp.eq.s32.totalorder %s12, 1
    %p189 = por %p187, %p188
    %p190 = scmp.ne.s32.totalorder %s182, %s185
    %p191 = scmp.eq.s32.totalorder %s12, 0
    %p192 = por %p190, %p191
    %p193 = scmp.ne.s32.totalorder %s182, %s185
    %p194 = scmp.eq.s32.totalorder %s17, 1
    %p195 = por %p193, %p194
    %p196 = scmp.ne.s32.totalorder %s185, %s186
    %p197 = scmp.eq.s32.totalorder %s17, 0
    %p198 = por %p196, %p197
    %p199 = scmp.ne.s32.totalorder %s185, %s186
    %p200 = scmp.eq.s32.totalorder %s18, 1
    %p201 = por %p199, %p200
    %p203 = scmp.ne.s32.totalorder %s186, %s202
    %p204 = scmp.eq.s32.totalorder %s18, 0
    %p205 = por %p203, %p204
    %p206 = scmp.le.s32.totalorder 1, %s12
    %p207 = scmp.lt.s32.totalorder %s12, 3
    %p208 = pnand %p206, %p207
    %p209 = pneg %p208
    // Predicated region
    $region9: #{gcn_forward.3} parent=5 // pred_check
      _
    $region10: #{gcn_forward.3} parent=5 // pred_check_branch
      %211 = sbr.rel (%p208) target = $region12
    $region11: #{gcn_forward.3} parent=5 // pred_region
      %s212 = ssub.s32 %s12, 1
      // Predicated region
      $region13: #{gcn_forward.3} parent=11 // pred_check
        %p213 = pneg %p78
      $region14: #{gcn_forward.3} parent=11 // pred_check_branch
        %215 = sbr.rel (%p213) target = $region16
      $region15: #{gcn_forward.3} parent=11 // pred_region
        %s216 = smul.u32 16, %s22
        %p217 = scmp.lt.s32.totalorder %s216, 15
        %s218 = scalar_select %p217, %s216, 15
        %s219 = smul.addr %s218, 4
        %s220 = scalar_lea.vmem %s1, %s219
        %s221 = smul.u32 16, %s22
      $region16: #{gcn_forward.3} parent=11 // pred_fallthru
        _
      // Predicated region
      $region17: #{gcn_forward.3} parent=11 // pred_check
        %p222 = pneg %p104
      $region18: #{gcn_forward.3} parent=11 // pred_check_branch
        %224 = sbr.rel (%p222) target = $region20
      $region19: #{gcn_forward.3} parent=11 // pred_region
        %s225 = smul.u32 16, %s22
        %p226 = scmp.lt.s32.totalorder %s225, 15
        %s227 = scalar_select %p226, %s225, 15
        %s228 = smul.addr %s227, 8
        %s229 = scalar_lea.vmem %s2, %s228
        %s230 = smul.u32 16, %s22
      $region20: #{gcn_forward.3} parent=11 // pred_fallthru
        _
      // Predicated region
      $region21: #{gcn_forward.3} parent=11 // pred_check
        %p231 = pneg %p125
      $region22: #{gcn_forward.3} parent=11 // pred_check_branch
        %233 = sbr.rel (%p231) target = $region24
      $region23: #{gcn_forward.3} parent=11 // pred_region
        _
      $region24: #{gcn_forward.3} parent=11 // pred_fallthru
        _
      // Predicated region
      $region25: #{gcn_forward.3} parent=11 // pred_check
        %p234 = pneg %p172
      $region26: #{gcn_forward.3} parent=11 // pred_check_branch
        %236 = sbr.rel (%p234) target = $region28
      $region27: #{gcn_forward.3} parent=11 // pred_region
        _
      $region28: #{gcn_forward.3} parent=11 // pred_fallthru
        _
    $region12: #{gcn_forward.3} parent=5 // pred_fallthru
      _
    %p237 = scmp.lt.s32.totalorder %s12, 2
    // Predicated region
    $region29: #{gcn_forward.3} parent=5 // pred_check
      %p238 = pneg %p237
    $region30: #{gcn_forward.3} parent=5 // pred_check_branch
      %240 = sbr.rel (%p238) target = $region32
    $region31: #{gcn_forward.3} parent=5 // pred_region
      // Predicated region
      $region33: #{gcn_forward.3} parent=31 // pred_check
        %p241 = pneg %p46
      $region34: #{gcn_forward.3} parent=31 // pred_check_branch
        %243 = sbr.rel (%p241) target = $region36
      $region35: #{gcn_forward.3} parent=31 // pred_region
        %s244 = smul.u32 2, %s19
        %p245 = scmp.lt.s32.totalorder %s244, 3
        %s246 = scalar_select %p245, %s244, 3
        %p247 = scmp.lt.s32.totalorder %s20, 0
        %s248 = scalar_select %p247, %s20, 0
        %s249 = sadd.s32 %s248, %s246
        %s250 = smul.addr %s249, 4
        %s251 = scalar_lea.vmem %s0, %s250
        %s252 = smul.u32 2, %s19
      $region36: #{gcn_forward.3} parent=31 // pred_fallthru
        _
      // Predicated region
      $region37: #{gcn_forward.3} parent=31 // pred_check
        %p253 = pneg %p145
      $region38: #{gcn_forward.3} parent=31 // pred_check_branch
        %255 = sbr.rel (%p253) target = $region40
      $region39: #{gcn_forward.3} parent=31 // pred_region
        %s256 = smul.u32 2, %s19
        %p257 = scmp.lt.s32.totalorder %s256, 3
        %s258 = scalar_select %p257, %s256, 3
        %s259 = smul.addr %s258, 8
        %s260 = scalar_lea.vmem %s4, %s259
        %s261 = smul.u32 2, %s19
      $region40: #{gcn_forward.3} parent=31 // pred_fallthru
        _
    $region32: #{gcn_forward.3} parent=5 // pred_fallthru
      _
    %p262 = scmp.le.s32.totalorder 1, %s12
    %p263 = scmp.lt.s32.totalorder %s12, 3
    %p264 = pnand %p262, %p263
    %p265 = pneg %p264
    // Predicated region
    $region41: #{gcn_forward.3} parent=5 // pred_check
      _
    $region42: #{gcn_forward.3} parent=5 // pred_check_branch
      %267 = sbr.rel (%p264) target = $region44
    $region43: #{gcn_forward.3} parent=5 // pred_region
      %s268 = ssub.s32 %s12, 1
      %s269 = smul.u32 2, %s21
      %p270 = scmp.lt.s32.totalorder %s269, 3
      %s271 = scalar_select %p270, %s269, 3
      %p272 = scmp.lt.s32.totalorder %s22, 0
      %s273 = scalar_select %p272, %s22, 0
      %s274 = sadd.s32 %s273, %s271
      %s275 = smul.addr %s274, 4
      %s276 = scalar_lea.vmem %s0, %s275
      %p277 = pneg %p52
      %p278 = pneg %p49
      %s279 = smul.u32 16, %s22
      %p280 = scmp.lt.s32.totalorder %s279, 15
      %s281 = scalar_select %p280, %s279, 15
      %s282 = smul.addr %s281, 4
      %s283 = scalar_lea.vmem %s1, %s282
      %p284 = pneg %p78
      %p285 = pneg %p75
      %s286 = smul.u32 16, %s22
      %p287 = scmp.lt.s32.totalorder %s286, 15
      %s288 = scalar_select %p287, %s286, 15
      %s289 = smul.addr %s288, 8
      %s290 = scalar_lea.vmem %s2, %s289
      %p291 = pneg %p104
      %p292 = pneg %p101
      %p293 = pneg %p125
      %p294 = pneg %p122
      %s295 = smul.u32 2, %s21
      %p296 = scmp.lt.s32.totalorder %s295, 3
      %s297 = scalar_select %p296, %s295, 3
      %s298 = smul.addr %s297, 8
      %s299 = scalar_lea.vmem %s4, %s298
      %p300 = pneg %p151
      %p301 = pneg %p148
      %p302 = pneg %p172
      %p303 = pneg %p169
      %p304 = pneg %p198
      %p305 = pneg %p195
      %s306 = smul.u32 2, %s21
      %p307 = scmp.lt.s32.totalorder %s306, 3
      %s308 = scalar_select %p307, %s306, 3
      %s309 = smul.addr %s308, 4
      %s310 = scalar_lea.vmem %s6, %s309
      %s311 = smul.u32 2, %s21
      %p312 = scmp.lt.s32.totalorder %s311, 3
      %s313 = scalar_select %p312, %s311, 3
      %p314 = scmp.lt.s32.totalorder %s22, 0
      %s315 = scalar_select %p314, %s22, 0
      %s316 = sadd.s32 %s315, %s313
      %s317 = smul.addr %s316, 4
      %s318 = scalar_lea.vmem %s0, %s317
      %s319 = smul.u32 2, %s21
      %s320 = smul.u32 16, %s22
      %p321 = scmp.lt.s32.totalorder %s320, 15
      %s322 = scalar_select %p321, %s320, 15
      %s323 = smul.addr %s322, 4
      %s324 = scalar_lea.vmem %s1, %s323
      %s325 = smul.u32 16, %s22
      %s326 = smul.u32 16, %s22
      %p327 = scmp.lt.s32.totalorder %s326, 15
      %s328 = scalar_select %p327, %s326, 15
      %s329 = smul.addr %s328, 8
      %s330 = scalar_lea.vmem %s2, %s329
      %s331 = smul.u32 16, %s22
      %s332 = smul.u32 2, %s21
      %p333 = scmp.lt.s32.totalorder %s332, 3
      %s334 = scalar_select %p333, %s332, 3
      %s335 = smul.addr %s334, 8
      %s336 = scalar_lea.vmem %s4, %s335
      %s337 = smul.u32 2, %s21
      %s338 = smul.u32 2, %s21
      %p339 = scmp.lt.s32.totalorder %s338, 3
      %s340 = scalar_select %p339, %s338, 3
      %s341 = smul.addr %s340, 4
      %s342 = scalar_lea.vmem %s6, %s341
      %s343 = smul.u32 2, %s21
      %p345 = scmp.eq.s32.totalorder %s21, 0
      // Predicated region
      $region45: #{gcn_forward.3} parent=43 // pred_check
        %p346 = pneg %p345
      $region46: #{gcn_forward.3} parent=43 // pred_check_branch
        %348 = sbr.rel (%p346) target = $region48
      $region47: #{gcn_forward.3} parent=43 // pred_region
        %v349 = vld [vmem:[%s324] sm:$0xf]
        %v350 = vld [vmem:[%s324 + $0x4] sm:$0xf]
        %v351 = vld [vmem:[%s324 + $0x8] sm:$0xf]
        %v352 = vld [vmem:[%s324 + $0xc] sm:$0xf]
        %v353 = vld [vmem:[%s324 + $0x10] sm:$0xf]
        %v354 = vld [vmem:[%s324 + $0x14] sm:$0xf]
        %v355 = vld [vmem:[%s324 + $0x18] sm:$0xf]
        %v356 = vld [vmem:[%s324 + $0x1c] sm:$0xf]
        %v357 = vld [vmem:[%s324 + $0x20] sm:$0xf]
        %v358 = vld [vmem:[%s324 + $0x24] sm:$0xf]
        %v359 = vld [vmem:[%s324 + $0x28] sm:$0xf]
        %v360 = vld [vmem:[%s324 + $0x2c] sm:$0xf]
        %v361 = vld [vmem:[%s324 + $0x30] sm:$0xf]
        %v362 = vld [vmem:[%s324 + $0x34] sm:$0xf]
        %v363 = vld [vmem:[%s324 + $0x38] sm:$0xf]
        %v364 = vld [vmem:[%s324 + $0x3c] sm:$0xf]
        %v365 = vld [vmem:[%s3] sm:$0xf]
        %v366 = vld [vmem:[%s3 + $0x4] sm:$0xf]
        %v367 = vld [vmem:[%s3 + $0x8] sm:$0xf]
        %v368 = vld [vmem:[%s3 + $0xc] sm:$0xf]
        %v369 = vld [vmem:[%s3 + $0x10] sm:$0xf]
        %v370 = vld [vmem:[%s3 + $0x14] sm:$0xf]
        %v371 = vld [vmem:[%s3 + $0x18] sm:$0xf]
        %v372 = vld [vmem:[%s3 + $0x1c] sm:$0xf]
        %v373 = vld [vmem:[%s3 + $0x20] sm:$0xf]
        %v374 = vld [vmem:[%s3 + $0x24] sm:$0xf]
        %v375 = vld [vmem:[%s3 + $0x28] sm:$0xf]
        %v376 = vld [vmem:[%s3 + $0x2c] sm:$0xf]
        %v377 = vld [vmem:[%s3 + $0x30] sm:$0xf]
        %v378 = vld [vmem:[%s3 + $0x34] sm:$0xf]
        %v379 = vld [vmem:[%s3 + $0x38] sm:$0xf]
        %v380 = vld [vmem:[%s3 + $0x3c] sm:$0xf]
        %v397 = vunpack.c.l.b16 %v349
        %v398 = vunpack.c.l.b16 %v350
        %v399 = vunpack.c.l.b16 %v351
        %v400 = vunpack.c.l.b16 %v352
        %v401 = vunpack.c.l.b16 %v353
        %v402 = vunpack.c.l.b16 %v354
        %v403 = vunpack.c.l.b16 %v355
        %v404 = vunpack.c.l.b16 %v356
        %v405 = vunpack.c.l.b16 %v357
        %v406 = vunpack.c.l.b16 %v358
        %v407 = vunpack.c.l.b16 %v359
        %v408 = vunpack.c.l.b16 %v360
        %v409 = vunpack.c.l.b16 %v361
        %v410 = vunpack.c.l.b16 %v362
        %v411 = vunpack.c.l.b16 %v363
        %v412 = vunpack.c.l.b16 %v364
        %v413 = vpack.c.b16 %v398, %v397
        %v414 = vpack.c.b16 %v400, %v399
        %v415 = vpack.c.b16 %v402, %v401
        %v416 = vpack.c.b16 %v404, %v403
        %v417 = vpack.c.b16 %v406, %v405
        %v418 = vpack.c.b16 %v408, %v407
        %v419 = vpack.c.b16 %v410, %v409
        %v420 = vpack.c.b16 %v412, %v411
        %v445 = vunpack.c.l.b16 %v365
        %v446 = vunpack.c.l.b16 %v366
        %v447 = vunpack.c.l.b16 %v367
        %v448 = vunpack.c.l.b16 %v368
        %v449 = vunpack.c.l.b16 %v369
        %v450 = vunpack.c.l.b16 %v370
        %v451 = vunpack.c.l.b16 %v371
        %v452 = vunpack.c.l.b16 %v372
        %v453 = vunpack.c.l.b16 %v373
        %v454 = vunpack.c.l.b16 %v374
        %v455 = vunpack.c.l.b16 %v375
        %v456 = vunpack.c.l.b16 %v376
        %v457 = vunpack.c.l.b16 %v377
        %v458 = vunpack.c.l.b16 %v378
        %v459 = vunpack.c.l.b16 %v379
        %v460 = vunpack.c.l.b16 %v380
        %v461 = vpack.c.b16 %v446, %v445
        %v462 = vpack.c.b16 %v448, %v447
        %v463 = vpack.c.b16 %v450, %v449
        %v464 = vpack.c.b16 %v452, %v451
        %v465 = vpack.c.b16 %v454, %v453
        %v466 = vpack.c.b16 %v456, %v455
        %v467 = vpack.c.b16 %v458, %v457
        %v468 = vpack.c.b16 %v460, %v459
        %477 = vmatprep.subr.bf16.mxu0 0
        %478 = vmatpush1.bf16.msra.mxu0 %v468
        %479 = vmatprep.subr.bf16.mxu0 0
        %480 = vmatpush1.bf16.msra.mxu0 %v467
        %481 = vmatprep.subr.bf16.mxu0 0
        %482 = vmatpush1.bf16.msra.mxu0 %v466
        %483 = vmatprep.subr.bf16.mxu0 0
        %484 = vmatpush1.bf16.msra.mxu0 %v465
        %485 = vmatprep.subr.bf16.mxu0 0
        %486 = vmatpush1.bf16.msra.mxu0 %v464
        %487 = vmatprep.subr.bf16.mxu0 0
        %488 = vmatpush1.bf16.msra.mxu0 %v463
        %489 = vmatprep.subr.bf16.mxu0 0
        %490 = vmatpush1.bf16.msra.mxu0 %v462
        %491 = vmatprep.subr.bf16.mxu0 0
        %492 = vmatpush1.bf16.msra.mxu0 %v461
        %493 = vmatprep.subr.bf16.mxu0 0
        %494 = vmatpush2.bf16.msra.mxu0 0
        %495 = vmatprep.subr.bf16.mxu0 0
        %496 = vmatpush2.bf16.msra.mxu0 0
        %497 = vmatprep.subr.bf16.mxu0 0
        %498 = vmatpush2.bf16.msra.mxu0 0
        %499 = vmatprep.subr.bf16.mxu0 0
        %500 = vmatpush2.bf16.msra.mxu0 0
        %501 = vmatprep.subr.bf16.mxu0 0
        %502 = vmatpush2.bf16.msra.mxu0 0
        %503 = vmatprep.subr.bf16.mxu0 0
        %504 = vmatpush2.bf16.msra.mxu0 0
        %505 = vmatprep.subr.bf16.mxu0 0
        %506 = vmatpush2.bf16.msra.mxu0 0
        %507 = vmatprep.subr.bf16.mxu0 0
        %508 = vmatpush2.bf16.msra.mxu0 0
        %509 = vmatprep.mubr.bf16.mxu0 0
        %510 = vmatmul.mubr.bf16.gmra.mxu0 %v413
        %v511 = vpop.f32.mrf.mxu0
        %v512 = vadd.f32 0.0, %v511
        %v513 = vpop.f32.mrf.mxu0
        %v514 = vpop.f32.mrf.mxu0
        %v515 = vadd.f32 0.0, %v514
        %v516 = vpop.f32.mrf.mxu0
        %517 = vmatprep.mubr.bf16.mxu0 0
        %518 = vmatmul.mubr.bf16.gmra.mxu0 %v414
        %v519 = vpop.f32.mrf.mxu0
        %v520 = vadd.f32 0.0, %v519
        %v521 = vpop.f32.mrf.mxu0
        %v522 = vpop.f32.mrf.mxu0
        %v523 = vadd.f32 0.0, %v522
        %v524 = vpop.f32.mrf.mxu0
        %525 = vmatprep.mubr.bf16.mxu0 0
        %526 = vmatmul.mubr.bf16.gmra.mxu0 %v415
        %v527 = vpop.f32.mrf.mxu0
        %v528 = vadd.f32 0.0, %v527
        %v529 = vpop.f32.mrf.mxu0
        %v530 = vpop.f32.mrf.mxu0
        %v531 = vadd.f32 0.0, %v530
        %v532 = vpop.f32.mrf.mxu0
        %533 = vmatprep.mubr.bf16.mxu0 0
        %534 = vmatmul.mubr.bf16.gmra.mxu0 %v416
        %v535 = vpop.f32.mrf.mxu0
        %v536 = vadd.f32 0.0, %v535
        %v537 = vpop.f32.mrf.mxu0
        %v538 = vpop.f32.mrf.mxu0
        %v539 = vadd.f32 0.0, %v538
        %v540 = vpop.f32.mrf.mxu0
        %541 = vmatprep.mubr.bf16.mxu0 0
        %542 = vmatmul.mubr.bf16.gmra.mxu0 %v417
        %v543 = vpop.f32.mrf.mxu0
        %v544 = vadd.f32 0.0, %v543
        %v545 = vpop.f32.mrf.mxu0
        %v546 = vpop.f32.mrf.mxu0
        %v547 = vadd.f32 0.0, %v546
        %v548 = vpop.f32.mrf.mxu0
        %549 = vmatprep.mubr.bf16.mxu0 0
        %550 = vmatmul.mubr.bf16.gmra.mxu0 %v418
        %v551 = vpop.f32.mrf.mxu0
        %v552 = vadd.f32 0.0, %v551
        %v553 = vpop.f32.mrf.mxu0
        %v554 = vpop.f32.mrf.mxu0
        %v555 = vadd.f32 0.0, %v554
        %v556 = vpop.f32.mrf.mxu0
        %557 = vmatprep.mubr.bf16.mxu0 0
        %558 = vmatmul.mubr.bf16.gmra.mxu0 %v419
        %v559 = vpop.f32.mrf.mxu0
        %v560 = vadd.f32 0.0, %v559
        %v561 = vpop.f32.mrf.mxu0
        %v562 = vpop.f32.mrf.mxu0
        %v563 = vadd.f32 0.0, %v562
        %v564 = vpop.f32.mrf.mxu0
        %565 = vmatprep.mubr.bf16.mxu0 0
        %566 = vmatmul.mubr.bf16.gmra.mxu0 %v420
        %v567 = vpop.f32.mrf.mxu0
        %v568 = vadd.f32 0.0, %v567
        %v569 = vpop.f32.mrf.mxu0
        %v570 = vpop.f32.mrf.mxu0
        %v571 = vadd.f32 0.0, %v570
        %v572 = vpop.f32.mrf.mxu0
        %573 = vdwg.mxu0
        %v574 = vld [vmem:[%s330] sm:$0xff]
        %v575 = vld [vmem:[%s330 + $0x8] sm:$0xff]
        %v576 = vld [vmem:[%s330 + $0x10] sm:$0xff]
        %v577 = vld [vmem:[%s330 + $0x18] sm:$0xff]
        %v578 = vld [vmem:[%s330 + $0x20] sm:$0xff]
        %v579 = vld [vmem:[%s330 + $0x28] sm:$0xff]
        %v580 = vld [vmem:[%s330 + $0x30] sm:$0xff]
        %v581 = vld [vmem:[%s330 + $0x38] sm:$0xff]
        %v582 = vld [vmem:[%s330 + $0x40] sm:$0xff]
        %v583 = vld [vmem:[%s330 + $0x48] sm:$0xff]
        %v584 = vld [vmem:[%s330 + $0x50] sm:$0xff]
        %v585 = vld [vmem:[%s330 + $0x58] sm:$0xff]
        %v586 = vld [vmem:[%s330 + $0x60] sm:$0xff]
        %v587 = vld [vmem:[%s330 + $0x68] sm:$0xff]
        %v588 = vld [vmem:[%s330 + $0x70] sm:$0xff]
        %v589 = vld [vmem:[%s330 + $0x78] sm:$0xff]
        %591 = vset.pattern.permute.xlu0 0
        %592 = vperm.xlu0 %591, %v574
        %v593 = vpop.permute.xlu0 %592
        %596 = vset.pattern.permute.xlu0 0
        %597 = vperm.xlu0 %596, %v575
        %v598 = vpop.permute.xlu0 %597
        %601 = vset.pattern.permute.xlu0 0
        %602 = vperm.xlu0 %601, %v576
        %v603 = vpop.permute.xlu0 %602
        %606 = vset.pattern.permute.xlu0 0
        %607 = vperm.xlu0 %606, %v577
        %v608 = vpop.permute.xlu0 %607
        %611 = vset.pattern.permute.xlu0 0
        %612 = vperm.xlu0 %611, %v578
        %v613 = vpop.permute.xlu0 %612
        %616 = vset.pattern.permute.xlu0 0
        %617 = vperm.xlu0 %616, %v579
        %v618 = vpop.permute.xlu0 %617
        %621 = vset.pattern.permute.xlu0 0
        %622 = vperm.xlu0 %621, %v580
        %v623 = vpop.permute.xlu0 %622
        %626 = vset.pattern.permute.xlu0 0
        %627 = vperm.xlu0 %626, %v581
        %v628 = vpop.permute.xlu0 %627
        %631 = vset.pattern.permute.xlu0 0
        %632 = vperm.xlu0 %631, %v582
        %v633 = vpop.permute.xlu0 %632
        %636 = vset.pattern.permute.xlu0 0
        %637 = vperm.xlu0 %636, %v583
        %v638 = vpop.permute.xlu0 %637
        %641 = vset.pattern.permute.xlu0 0
        %642 = vperm.xlu0 %641, %v584
        %v643 = vpop.permute.xlu0 %642
        %646 = vset.pattern.permute.xlu0 0
        %647 = vperm.xlu0 %646, %v585
        %v648 = vpop.permute.xlu0 %647
        %651 = vset.pattern.permute.xlu0 0
        %652 = vperm.xlu0 %651, %v586
        %v653 = vpop.permute.xlu0 %652
        %656 = vset.pattern.permute.xlu0 0
        %657 = vperm.xlu0 %656, %v587
        %v658 = vpop.permute.xlu0 %657
        %661 = vset.pattern.permute.xlu0 0
        %662 = vperm.xlu0 %661, %v588
        %v663 = vpop.permute.xlu0 %662
        %666 = vset.pattern.permute.xlu0 0
        %667 = vperm.xlu0 %666, %v589
        %v668 = vpop.permute.xlu0 %667
        %v670 = vmul.f32 %v512, %v593
        %v671 = vmul.f32 %v515, %v598
        %v672 = vmul.f32 %v520, %v603
        %v673 = vmul.f32 %v523, %v608
        %v674 = vmul.f32 %v528, %v613
        %v675 = vmul.f32 %v531, %v618
        %v676 = vmul.f32 %v536, %v623
        %v677 = vmul.f32 %v539, %v628
        %v678 = vmul.f32 %v544, %v633
        %v679 = vmul.f32 %v547, %v638
        %v680 = vmul.f32 %v552, %v643
        %v681 = vmul.f32 %v555, %v648
        %v682 = vmul.f32 %v560, %v653
        %v683 = vmul.f32 %v563, %v658
        %v684 = vmul.f32 %v568, %v663
        %v685 = vmul.f32 %v571, %v668
        %v686 = vpack.c.bf16 %v671, %v670
        %v687 = vpack.c.bf16 %v673, %v672
        %v688 = vpack.c.bf16 %v675, %v674
        %v689 = vpack.c.bf16 %v677, %v676
        %v690 = vpack.c.bf16 %v679, %v678
        %v691 = vpack.c.bf16 %v681, %v680
        %v692 = vpack.c.bf16 %v683, %v682
        %v693 = vpack.c.bf16 %v685, %v684
        %v702 = vunpack.c.l.b16 %v686
        %v703 = vunpack.c.h.b16 %v686
        %v704 = vunpack.c.l.b16 %v687
        %v705 = vunpack.c.h.b16 %v687
        %v706 = vunpack.c.l.b16 %v688
        %v707 = vunpack.c.h.b16 %v688
        %v708 = vunpack.c.l.b16 %v689
        %v709 = vunpack.c.h.b16 %v689
        %v710 = vunpack.c.l.b16 %v690
        %v711 = vunpack.c.h.b16 %v690
        %v712 = vunpack.c.l.b16 %v691
        %v713 = vunpack.c.h.b16 %v691
        %v714 = vunpack.c.l.b16 %v692
        %v715 = vunpack.c.h.b16 %v692
        %v716 = vunpack.c.l.b16 %v693
        %v717 = vunpack.c.h.b16 %v693
        %v718 = vpack.c.b16 %v702, %v702
        %v719 = vpack.c.b16 %v703, %v703
        %v720 = vpack.c.b16 %v704, %v704
        %v721 = vpack.c.b16 %v705, %v705
        %v722 = vpack.c.b16 %v706, %v706
        %v723 = vpack.c.b16 %v707, %v707
        %v724 = vpack.c.b16 %v708, %v708
        %v725 = vpack.c.b16 %v709, %v709
        %v726 = vpack.c.b16 %v710, %v710
        %v727 = vpack.c.b16 %v711, %v711
        %v728 = vpack.c.b16 %v712, %v712
        %v729 = vpack.c.b16 %v713, %v713
        %v730 = vpack.c.b16 %v714, %v714
        %v731 = vpack.c.b16 %v715, %v715
        %v732 = vpack.c.b16 %v716, %v716
        %v733 = vpack.c.b16 %v717, %v717
        %s750 = smul.u32 %s22, 16
        %s751 = smul.addr %s750, 4
        %s752 = scalar_lea.vmem [#allocation3], %s751
        %753 = vst [vmem:[%s752] sm:$0xf] %v718
        %754 = vst [vmem:[%s752 + $0x4] sm:$0xf] %v719
        %755 = vst [vmem:[%s752 + $0x8] sm:$0xf] %v720
        %756 = vst [vmem:[%s752 + $0xc] sm:$0xf] %v721
        %757 = vst [vmem:[%s752 + $0x10] sm:$0xf] %v722
        %758 = vst [vmem:[%s752 + $0x14] sm:$0xf] %v723
        %759 = vst [vmem:[%s752 + $0x18] sm:$0xf] %v724
        %760 = vst [vmem:[%s752 + $0x1c] sm:$0xf] %v725
        %761 = vst [vmem:[%s752 + $0x20] sm:$0xf] %v726
        %762 = vst [vmem:[%s752 + $0x24] sm:$0xf] %v727
        %763 = vst [vmem:[%s752 + $0x28] sm:$0xf] %v728
        %764 = vst [vmem:[%s752 + $0x2c] sm:$0xf] %v729
        %765 = vst [vmem:[%s752 + $0x30] sm:$0xf] %v730
        %766 = vst [vmem:[%s752 + $0x34] sm:$0xf] %v731
        %767 = vst [vmem:[%s752 + $0x38] sm:$0xf] %v732
        %768 = vst [vmem:[%s752 + $0x3c] sm:$0xf] %v733
      $region48: #{gcn_forward.3} parent=43 // pred_fallthru
        _
      %p769 = scmp.eq.s32.totalorder %s22, 0
      // Predicated region
      $region49: #{gcn_forward.3} parent=43 // pred_check
        %p770 = pneg %p769
      $region50: #{gcn_forward.3} parent=43 // pred_check_branch
        %772 = sbr.rel (%p770) target = $region52
      $region51: #{gcn_forward.3} parent=43 // pred_region
        %773 = vst [vmem:[#allocation2] sm:$0xff] 0.0
        %774 = vst [vmem:[#allocation2 + $0x8] sm:$0xff] 0.0
      $region52: #{gcn_forward.3} parent=43 // pred_fallthru
        _
      %v775 = vld [vmem:[#allocation2] sm:$0xff]
      %v776 = vld [vmem:[#allocation2 + $0x8] sm:$0xff]
      %v777 = vld [vmem:[%s318] sm:$0xf]
      %v778 = vld [vmem:[%s318 + $0x4] sm:$0xf]
      %s779 = smul.u32 %s22, 16
      %s780 = smul.addr %s779, 4
      %s781 = scalar_lea.vmem [#allocation3], %s780
      %v782 = vld [vmem:[%s781] sm:$0xf]
      %v783 = vld [vmem:[%s781 + $0x4] sm:$0xf]
      %v784 = vld [vmem:[%s781 + $0x8] sm:$0xf]
      %v785 = vld [vmem:[%s781 + $0xc] sm:$0xf]
      %v786 = vld [vmem:[%s781 + $0x10] sm:$0xf]
      %v787 = vld [vmem:[%s781 + $0x14] sm:$0xf]
      %v788 = vld [vmem:[%s781 + $0x18] sm:$0xf]
      %v789 = vld [vmem:[%s781 + $0x1c] sm:$0xf]
      %v790 = vld [vmem:[%s781 + $0x20] sm:$0xf]
      %v791 = vld [vmem:[%s781 + $0x24] sm:$0xf]
      %v792 = vld [vmem:[%s781 + $0x28] sm:$0xf]
      %v793 = vld [vmem:[%s781 + $0x2c] sm:$0xf]
      %v794 = vld [vmem:[%s781 + $0x30] sm:$0xf]
      %v795 = vld [vmem:[%s781 + $0x34] sm:$0xf]
      %v796 = vld [vmem:[%s781 + $0x38] sm:$0xf]
      %v797 = vld [vmem:[%s781 + $0x3c] sm:$0xf]
      %v800 = vunpack.c.l.b16 %v777
      %v801 = vunpack.c.l.b16 %v778
      %v802 = vpack.c.b16 %v801, %v800
      %v820 = vunpack.c.l.b16 %v782
      %v821 = vunpack.c.l.b16 %v783
      %v822 = vunpack.c.l.b16 %v784
      %v823 = vunpack.c.l.b16 %v785
      %v824 = vunpack.c.l.b16 %v786
      %v825 = vunpack.c.l.b16 %v787
      %v826 = vunpack.c.l.b16 %v788
      %v827 = vunpack.c.l.b16 %v789
      %v828 = vunpack.c.l.b16 %v790
      %v829 = vunpack.c.l.b16 %v791
      %v830 = vunpack.c.l.b16 %v792
      %v831 = vunpack.c.l.b16 %v793
      %v832 = vunpack.c.l.b16 %v794
      %v833 = vunpack.c.l.b16 %v795
      %v834 = vunpack.c.l.b16 %v796
      %v835 = vunpack.c.l.b16 %v797
      %v836 = vpack.c.b16 %v821, %v820
      %v837 = vpack.c.b16 %v823, %v822
      %v838 = vpack.c.b16 %v825, %v824
      %v839 = vpack.c.b16 %v827, %v826
      %v840 = vpack.c.b16 %v829, %v828
      %v841 = vpack.c.b16 %v831, %v830
      %v842 = vpack.c.b16 %v833, %v832
      %v843 = vpack.c.b16 %v835, %v834
      %852 = vmatprep.subr.bf16.mxu0 0
      %853 = vmatpush1.bf16.msra.mxu0 %v843
      %854 = vmatprep.subr.bf16.mxu0 0
      %855 = vmatpush1.bf16.msra.mxu0 %v842
      %856 = vmatprep.subr.bf16.mxu0 0
      %857 = vmatpush1.bf16.msra.mxu0 %v841
      %858 = vmatprep.subr.bf16.mxu0 0
      %859 = vmatpush1.bf16.msra.mxu0 %v840
      %860 = vmatprep.subr.bf16.mxu0 0
      %861 = vmatpush1.bf16.msra.mxu0 %v839
      %862 = vmatprep.subr.bf16.mxu0 0
      %863 = vmatpush1.bf16.msra.mxu0 %v838
      %864 = vmatprep.subr.bf16.mxu0 0
      %865 = vmatpush1.bf16.msra.mxu0 %v837
      %866 = vmatprep.subr.bf16.mxu0 0
      %867 = vmatpush1.bf16.msra.mxu0 %v836
      %868 = vmatprep.subr.bf16.mxu0 0
      %869 = vmatpush2.bf16.msra.mxu0 0
      %870 = vmatprep.subr.bf16.mxu0 0
      %871 = vmatpush2.bf16.msra.mxu0 0
      %872 = vmatprep.subr.bf16.mxu0 0
      %873 = vmatpush2.bf16.msra.mxu0 0
      %874 = vmatprep.subr.bf16.mxu0 0
      %875 = vmatpush2.bf16.msra.mxu0 0
      %876 = vmatprep.subr.bf16.mxu0 0
      %877 = vmatpush2.bf16.msra.mxu0 0
      %878 = vmatprep.subr.bf16.mxu0 0
      %879 = vmatpush2.bf16.msra.mxu0 0
      %880 = vmatprep.subr.bf16.mxu0 0
      %881 = vmatpush2.bf16.msra.mxu0 0
      %882 = vmatprep.subr.bf16.mxu0 0
      %883 = vmatpush2.bf16.msra.mxu0 0
      %884 = vmatprep.mubr.bf16.mxu0 0
      %885 = vmatmul.mubr.bf16.gmra.mxu0 %v802
      %v886 = vpop.f32.mrf.mxu0
      %v887 = vadd.f32 0.0, %v886
      %v888 = vpop.f32.mrf.mxu0
      %v889 = vpop.f32.mrf.mxu0
      %v890 = vadd.f32 0.0, %v889
      %v891 = vpop.f32.mrf.mxu0
      %892 = vdwg.mxu0
      %v893 = vadd.f32 %v775, %v887
      %v894 = vadd.f32 %v776, %v890
      %895 = vst [vmem:[#allocation2] sm:$0xff] %v893
      %896 = vst [vmem:[#allocation2 + $0x8] sm:$0xff] %v894
      // Predicated region
      $region53: #{gcn_forward.3} parent=43 // pred_check
        %p897 = pneg %p769
      $region54: #{gcn_forward.3} parent=43 // pred_check_branch
        %899 = sbr.rel (%p897) target = $region56
      $region55: #{gcn_forward.3} parent=43 // pred_region
        %v900 = vld [vmem:[#allocation2] sm:$0xff]
        %v901 = vld [vmem:[#allocation2 + $0x8] sm:$0xff]
        %v902 = vld [vmem:[%s336] sm:$0xff]
        %v903 = vld [vmem:[%s336 + $0x8] sm:$0xff]
        %905 = vset.pattern.permute.xlu0 0
        %906 = vperm.xlu0 %905, %v902
        %v907 = vpop.permute.xlu0 %906
        %910 = vset.pattern.permute.xlu0 0
        %911 = vperm.xlu0 %910, %v903
        %v912 = vpop.permute.xlu0 %911
        %v914 = vmul.f32 %v900, %v907
        %v915 = vmul.f32 %v901, %v912
        %v916 = vld [vmem:[%s5] sm:$0x1]
        %v918 = vlaneseq
        %v919 = vshrl.u32 %v918, 7
        %v920 = vsub.s32 0, %v919
        %v921 = vrot.slane %v916, %v920
        %v923 = vadd.f32 %v914, %v921
        %v924 = vadd.f32 %v915, %v921
        %v925 = vmax.f32 %v923, 0.0
        %v926 = vmax.f32 %v924, 0.0
        %v927 = vpack.c.bf16 %v926, %v925
        %v929 = vunpack.c.l.b16 %v927
        %v930 = vunpack.c.h.b16 %v927
        %v931 = vpack.c.b16 %v929, %v929
        %v932 = vpack.c.b16 %v930, %v930
        %935 = vst [vmem:[%s342] sm:$0xf] %v931
        %936 = vst [vmem:[%s342 + $0x4] sm:$0xf] %v932
      $region56: #{gcn_forward.3} parent=43 // pred_fallthru
        _
      %s937 = smul.u32 2, %s21
      %p938 = scmp.lt.s32.totalorder %s937, 3
      %s939 = scalar_select %p938, %s937, 3
      %s940 = smul.addr %s939, 4
      %s941 = scalar_lea.vmem %s6, %s940
      // Predicated region
      $region57: #{gcn_forward.3} parent=43 // pred_check
        %p942 = pneg %p195
      $region58: #{gcn_forward.3} parent=43 // pred_check_branch
        %944 = sbr.rel (%p942) target = $region60
      $region59: #{gcn_forward.3} parent=43 // pred_region
        %s945 = smul.u32 2, %s21
      $region60: #{gcn_forward.3} parent=43 // pred_fallthru
        _
    $region44: #{gcn_forward.3} parent=5 // pred_fallthru
      _
    %p946 = scmp.le.s32.totalorder 2, %s12
    // Predicated region
    $region61: #{gcn_forward.3} parent=5 // pred_check
      %p947 = pneg %p946
    $region62: #{gcn_forward.3} parent=5 // pred_check_branch
      %949 = sbr.rel (%p947) target = $region64
    $region63: #{gcn_forward.3} parent=5 // pred_region
      %s950 = ssub.s32 %s12, 2
      // Predicated region
      $region65: #{gcn_forward.3} parent=63 // pred_check
        %p951 = pneg %p201
      $region66: #{gcn_forward.3} parent=63 // pred_check_branch
        %953 = sbr.rel (%p951) target = $region68
      $region67: #{gcn_forward.3} parent=63 // pred_region
        %s954 = smul.u32 2, %s23
        %p955 = scmp.lt.s32.totalorder %s954, 3
        %s956 = scalar_select %p955, %s954, 3
        %s957 = smul.addr %s956, 4
        %s958 = scalar_lea.vmem %s6, %s957
      $region68: #{gcn_forward.3} parent=63 // pred_fallthru
        _
    $region64: #{gcn_forward.3} parent=5 // pred_fallthru
      _
  $region6: #{gcn_forward.3} parent=0 // loop_footer
    %s16 = sadd.s32 1, %s12
  $region7: #{gcn_forward.3} parent=0 // loop_footer_branch
    %11 = sbr.rel target = $region3
  $region8: #{gcn_forward.3} parent=0 // loop_exit
    _

// kernel: gcn_forward.5
$region0: #{gcn_forward.5}
  #allocation0 [shape = 'u32[]', space=smem, size = 0x4, offset = 0x4, fixed_abs, tag = 'smem constant byte address 0x4 - core index']
  #allocation1 [shape = 'u32[144,128]{1,0:T(1,128)}', space=vmem, size = 0x12000, scoped, tag = 'internal scratch']
  #allocation2 [shape = 'f32[16,128]{1,0:T(8,128)}', space=vmem, size = 0x2000, scoped, tag = 'scratch operand']
  #allocation3 [shape = 'bf16[1,128,128]{2,1,0:T(8,128)(2,1)}', space=vmem, size = 0x8000, scoped, tag = 'scratch operand']
  %s0 = inlined_call_operand.vmem [shape: bf16[16,128], index: 0, kind: input, shape index: {}]
  %s1 = inlined_call_operand.vmem [shape: bf16[128,128], index: 1, kind: input, shape index: {}]
  %s2 = inlined_call_operand.vmem [shape: f32[128,1], index: 2, kind: input, shape index: {}]
  %s3 = inlined_call_operand.vmem [shape: bf16[128,128], index: 3, kind: input, shape index: {}]
  %s4 = inlined_call_operand.vmem [shape: f32[16,1], index: 4, kind: input, shape index: {}]
  %s5 = inlined_call_operand.vmem [shape: f32[1,128], index: 5, kind: input, shape index: {}]
  %s6 = inlined_call_operand.hbm [shape: bf16[16,128], index: 6, kind: output, shape index: {}]
  %s7 = sld [smem:[#allocation0]]
  $region46: #{gcn_forward.5} parent=0
    _
  %s9 = ssub.s32 1, %s7
  %s10 = scalar_select 0, %s9, %s7
  $region1: #{gcn_forward.5} parent=0
    #allocation4 [shape = 'u8[4096]{0}', space=vmem, size = 0x1000, scoped, tag = 'output window, operand 0, single buffered']
    #allocation5 [shape = 's32[1]{0}', space=sflag, size = 0x4, scoped, tag = 'scoped memory for gcn_forward.5']
    %11 = vsyncpa [#allocation5], 0
    // Predicated region
    $region2: #{gcn_forward.5} parent=1 // pred_check
      _
    $region3: #{gcn_forward.5} parent=1 // pred_check_branch
      %13 = sbr.rel (0) target = $region5
    $region4: #{gcn_forward.5} parent=1 // pred_region
      _
    $region5: #{gcn_forward.5} parent=1 // pred_fallthru
      _
    // Predicated region
    $region6: #{gcn_forward.5} parent=1 // pred_check
      _
    $region7: #{gcn_forward.5} parent=1 // pred_check_branch
      %15 = sbr.rel (0) target = $region9
    $region8: #{gcn_forward.5} parent=1 // pred_region
      _
    $region9: #{gcn_forward.5} parent=1 // pred_fallthru
      _
    // Predicated region
    $region10: #{gcn_forward.5} parent=1 // pred_check
      _
    $region11: #{gcn_forward.5} parent=1 // pred_check_branch
      %17 = sbr.rel (0) target = $region13
    $region12: #{gcn_forward.5} parent=1 // pred_region
      _
    $region13: #{gcn_forward.5} parent=1 // pred_fallthru
      _
    // Predicated region
    $region14: #{gcn_forward.5} parent=1 // pred_check
      _
    $region15: #{gcn_forward.5} parent=1 // pred_check_branch
      %19 = sbr.rel (0) target = $region17
    $region16: #{gcn_forward.5} parent=1 // pred_region
      _
    $region17: #{gcn_forward.5} parent=1 // pred_fallthru
      _
    // Predicated region
    $region18: #{gcn_forward.5} parent=1 // pred_check
      _
    $region19: #{gcn_forward.5} parent=1 // pred_check_branch
      %21 = sbr.rel (0) target = $region21
    $region20: #{gcn_forward.5} parent=1 // pred_region
      _
    $region21: #{gcn_forward.5} parent=1 // pred_fallthru
      _
    // Predicated region
    $region22: #{gcn_forward.5} parent=1 // pred_check
      _
    $region23: #{gcn_forward.5} parent=1 // pred_check_branch
      %23 = sbr.rel (0) target = $region25
    $region24: #{gcn_forward.5} parent=1 // pred_region
      _
    $region25: #{gcn_forward.5} parent=1 // pred_fallthru
      _
    %p25 = scmp.eq.s32.totalorder 0, 0
    // Predicated region
    $region26: #{gcn_forward.5} parent=1 // pred_check
      %p26 = pneg %p25
    $region27: #{gcn_forward.5} parent=1 // pred_check_branch
      %28 = sbr.rel (%p26) target = $region29
    $region28: #{gcn_forward.5} parent=1 // pred_region
      %v29 = vld [vmem:[%s1] sm:$0xf]
      %v30 = vld [vmem:[%s1 + $0x4] sm:$0xf]
      %v31 = vld [vmem:[%s1 + $0x8] sm:$0xf]
      %v32 = vld [vmem:[%s1 + $0xc] sm:$0xf]
      %v33 = vld [vmem:[%s1 + $0x10] sm:$0xf]
      %v34 = vld [vmem:[%s1 + $0x14] sm:$0xf]
      %v35 = vld [vmem:[%s1 + $0x18] sm:$0xf]
      %v36 = vld [vmem:[%s1 + $0x1c] sm:$0xf]
      %v37 = vld [vmem:[%s1 + $0x20] sm:$0xf]
      %v38 = vld [vmem:[%s1 + $0x24] sm:$0xf]
      %v39 = vld [vmem:[%s1 + $0x28] sm:$0xf]
      %v40 = vld [vmem:[%s1 + $0x2c] sm:$0xf]
      %v41 = vld [vmem:[%s1 + $0x30] sm:$0xf]
      %v42 = vld [vmem:[%s1 + $0x34] sm:$0xf]
      %v43 = vld [vmem:[%s1 + $0x38] sm:$0xf]
      %v44 = vld [vmem:[%s1 + $0x3c] sm:$0xf]
      %v45 = vld [vmem:[%s3] sm:$0xf]
      %v46 = vld [vmem:[%s3 + $0x4] sm:$0xf]
      %v47 = vld [vmem:[%s3 + $0x8] sm:$0xf]
      %v48 = vld [vmem:[%s3 + $0xc] sm:$0xf]
      %v49 = vld [vmem:[%s3 + $0x10] sm:$0xf]
      %v50 = vld [vmem:[%s3 + $0x14] sm:$0xf]
      %v51 = vld [vmem:[%s3 + $0x18] sm:$0xf]
      %v52 = vld [vmem:[%s3 + $0x1c] sm:$0xf]
      %v53 = vld [vmem:[%s3 + $0x20] sm:$0xf]
      %v54 = vld [vmem:[%s3 + $0x24] sm:$0xf]
      %v55 = vld [vmem:[%s3 + $0x28] sm:$0xf]
      %v56 = vld [vmem:[%s3 + $0x2c] sm:$0xf]
      %v57 = vld [vmem:[%s3 + $0x30] sm:$0xf]
      %v58 = vld [vmem:[%s3 + $0x34] sm:$0xf]
      %v59 = vld [vmem:[%s3 + $0x38] sm:$0xf]
      %v60 = vld [vmem:[%s3 + $0x3c] sm:$0xf]
      %v77 = vunpack.c.l.b16 %v29
      %v78 = vunpack.c.l.b16 %v30
      %v79 = vunpack.c.l.b16 %v31
      %v80 = vunpack.c.l.b16 %v32
      %v81 = vunpack.c.l.b16 %v33
      %v82 = vunpack.c.l.b16 %v34
      %v83 = vunpack.c.l.b16 %v35
      %v84 = vunpack.c.l.b16 %v36
      %v85 = vunpack.c.l.b16 %v37
      %v86 = vunpack.c.l.b16 %v38
      %v87 = vunpack.c.l.b16 %v39
      %v88 = vunpack.c.l.b16 %v40
      %v89 = vunpack.c.l.b16 %v41
      %v90 = vunpack.c.l.b16 %v42
      %v91 = vunpack.c.l.b16 %v43
      %v92 = vunpack.c.l.b16 %v44
      %v93 = vpack.c.b16 %v78, %v77
      %v94 = vpack.c.b16 %v80, %v79
      %v95 = vpack.c.b16 %v82, %v81
      %v96 = vpack.c.b16 %v84, %v83
      %v97 = vpack.c.b16 %v86, %v85
      %v98 = vpack.c.b16 %v88, %v87
      %v99 = vpack.c.b16 %v90, %v89
      %v100 = vpack.c.b16 %v92, %v91
      %v125 = vunpack.c.l.b16 %v45
      %v126 = vunpack.c.l.b16 %v46
      %v127 = vunpack.c.l.b16 %v47
      %v128 = vunpack.c.l.b16 %v48
      %v129 = vunpack.c.l.b16 %v49
      %v130 = vunpack.c.l.b16 %v50
      %v131 = vunpack.c.l.b16 %v51
      %v132 = vunpack.c.l.b16 %v52
      %v133 = vunpack.c.l.b16 %v53
      %v134 = vunpack.c.l.b16 %v54
      %v135 = vunpack.c.l.b16 %v55
      %v136 = vunpack.c.l.b16 %v56
      %v137 = vunpack.c.l.b16 %v57
      %v138 = vunpack.c.l.b16 %v58
      %v139 = vunpack.c.l.b16 %v59
      %v140 = vunpack.c.l.b16 %v60
      %v141 = vpack.c.b16 %v126, %v125
      %v142 = vpack.c.b16 %v128, %v127
      %v143 = vpack.c.b16 %v130, %v129
      %v144 = vpack.c.b16 %v132, %v131
      %v145 = vpack.c.b16 %v134, %v133
      %v146 = vpack.c.b16 %v136, %v135
      %v147 = vpack.c.b16 %v138, %v137
      %v148 = vpack.c.b16 %v140, %v139
      %157 = vmatprep.subr.bf16.mxu0 0
      %158 = vmatpush1.bf16.msra.mxu0 %v148
      %159 = vmatprep.subr.bf16.mxu0 0
      %160 = vmatpush1.bf16.msra.mxu0 %v147
      %161 = vmatprep.subr.bf16.mxu0 0
      %162 = vmatpush1.bf16.msra.mxu0 %v146
      %163 = vmatprep.subr.bf16.mxu0 0
      %164 = vmatpush1.bf16.msra.mxu0 %v145
      %165 = vmatprep.subr.bf16.mxu0 0
      %166 = vmatpush1.bf16.msra.mxu0 %v144
      %167 = vmatprep.subr.bf16.mxu0 0
      %168 = vmatpush1.bf16.msra.mxu0 %v143
      %169 = vmatprep.subr.bf16.mxu0 0
      %170 = vmatpush1.bf16.msra.mxu0 %v142
      %171 = vmatprep.subr.bf16.mxu0 0
      %172 = vmatpush1.bf16.msra.mxu0 %v141
      %173 = vmatprep.subr.bf16.mxu0 0
      %174 = vmatpush2.bf16.msra.mxu0 0
      %175 = vmatprep.subr.bf16.mxu0 0
      %176 = vmatpush2.bf16.msra.mxu0 0
      %177 = vmatprep.subr.bf16.mxu0 0
      %178 = vmatpush2.bf16.msra.mxu0 0
      %179 = vmatprep.subr.bf16.mxu0 0
      %180 = vmatpush2.bf16.msra.mxu0 0
      %181 = vmatprep.subr.bf16.mxu0 0
      %182 = vmatpush2.bf16.msra.mxu0 0
      %183 = vmatprep.subr.bf16.mxu0 0
      %184 = vmatpush2.bf16.msra.mxu0 0
      %185 = vmatprep.subr.bf16.mxu0 0
      %186 = vmatpush2.bf16.msra.mxu0 0
      %187 = vmatprep.subr.bf16.mxu0 0
      %188 = vmatpush2.bf16.msra.mxu0 0
      %189 = vmatprep.mubr.bf16.mxu0 0
      %190 = vmatmul.mubr.bf16.gmra.mxu0 %v93
      %v191 = vpop.f32.mrf.mxu0
      %v192 = vadd.f32 0.0, %v191
      %v193 = vpop.f32.mrf.mxu0
      %v194 = vpop.f32.mrf.mxu0
      %v195 = vadd.f32 0.0, %v194
      %v196 = vpop.f32.mrf.mxu0
      %197 = vmatprep.mubr.bf16.mxu0 0
      %198 = vmatmul.mubr.bf16.gmra.mxu0 %v94
      %v199 = vpop.f32.mrf.mxu0
      %v200 = vadd.f32 0.0, %v199
      %v201 = vpop.f32.mrf.mxu0
      %v202 = vpop.f32.mrf.mxu0
      %v203 = vadd.f32 0.0, %v202
      %v204 = vpop.f32.mrf.mxu0
      %205 = vmatprep.mubr.bf16.mxu0 0
      %206 = vmatmul.mubr.bf16.gmra.mxu0 %v95
      %v207 = vpop.f32.mrf.mxu0
      %v208 = vadd.f32 0.0, %v207
      %v209 = vpop.f32.mrf.mxu0
      %v210 = vpop.f32.mrf.mxu0
      %v211 = vadd.f32 0.0, %v210
      %v212 = vpop.f32.mrf.mxu0
      %213 = vmatprep.mubr.bf16.mxu0 0
      %214 = vmatmul.mubr.bf16.gmra.mxu0 %v96
      %v215 = vpop.f32.mrf.mxu0
      %v216 = vadd.f32 0.0, %v215
      %v217 = vpop.f32.mrf.mxu0
      %v218 = vpop.f32.mrf.mxu0
      %v219 = vadd.f32 0.0, %v218
      %v220 = vpop.f32.mrf.mxu0
      %221 = vmatprep.mubr.bf16.mxu0 0
      %222 = vmatmul.mubr.bf16.gmra.mxu0 %v97
      %v223 = vpop.f32.mrf.mxu0
      %v224 = vadd.f32 0.0, %v223
      %v225 = vpop.f32.mrf.mxu0
      %v226 = vpop.f32.mrf.mxu0
      %v227 = vadd.f32 0.0, %v226
      %v228 = vpop.f32.mrf.mxu0
      %229 = vmatprep.mubr.bf16.mxu0 0
      %230 = vmatmul.mubr.bf16.gmra.mxu0 %v98
      %v231 = vpop.f32.mrf.mxu0
      %v232 = vadd.f32 0.0, %v231
      %v233 = vpop.f32.mrf.mxu0
      %v234 = vpop.f32.mrf.mxu0
      %v235 = vadd.f32 0.0, %v234
      %v236 = vpop.f32.mrf.mxu0
      %237 = vmatprep.mubr.bf16.mxu0 0
      %238 = vmatmul.mubr.bf16.gmra.mxu0 %v99
      %v239 = vpop.f32.mrf.mxu0
      %v240 = vadd.f32 0.0, %v239
      %v241 = vpop.f32.mrf.mxu0
      %v242 = vpop.f32.mrf.mxu0
      %v243 = vadd.f32 0.0, %v242
      %v244 = vpop.f32.mrf.mxu0
      %245 = vmatprep.mubr.bf16.mxu0 0
      %246 = vmatmul.mubr.bf16.gmra.mxu0 %v100
      %v247 = vpop.f32.mrf.mxu0
      %v248 = vadd.f32 0.0, %v247
      %v249 = vpop.f32.mrf.mxu0
      %v250 = vpop.f32.mrf.mxu0
      %v251 = vadd.f32 0.0, %v250
      %v252 = vpop.f32.mrf.mxu0
      %253 = vdwg.mxu0
      %v254 = vld [vmem:[%s2] sm:$0xff]
      %v255 = vld [vmem:[%s2 + $0x8] sm:$0xff]
      %v256 = vld [vmem:[%s2 + $0x10] sm:$0xff]
      %v257 = vld [vmem:[%s2 + $0x18] sm:$0xff]
      %v258 = vld [vmem:[%s2 + $0x20] sm:$0xff]
      %v259 = vld [vmem:[%s2 + $0x28] sm:$0xff]
      %v260 = vld [vmem:[%s2 + $0x30] sm:$0xff]
      %v261 = vld [vmem:[%s2 + $0x38] sm:$0xff]
      %v262 = vld [vmem:[%s2 + $0x40] sm:$0xff]
      %v263 = vld [vmem:[%s2 + $0x48] sm:$0xff]
      %v264 = vld [vmem:[%s2 + $0x50] sm:$0xff]
      %v265 = vld [vmem:[%s2 + $0x58] sm:$0xff]
      %v266 = vld [vmem:[%s2 + $0x60] sm:$0xff]
      %v267 = vld [vmem:[%s2 + $0x68] sm:$0xff]
      %v268 = vld [vmem:[%s2 + $0x70] sm:$0xff]
      %v269 = vld [vmem:[%s2 + $0x78] sm:$0xff]
      %271 = vset.pattern.permute.xlu0 0
      %272 = vperm.xlu0 %271, %v254
      %v273 = vpop.permute.xlu0 %272
      %276 = vset.pattern.permute.xlu0 0
      %277 = vperm.xlu0 %276, %v255
      %v278 = vpop.permute.xlu0 %277
      %281 = vset.pattern.permute.xlu0 0
      %282 = vperm.xlu0 %281, %v256
      %v283 = vpop.permute.xlu0 %282
      %286 = vset.pattern.permute.xlu0 0
      %287 = vperm.xlu0 %286, %v257
      %v288 = vpop.permute.xlu0 %287
      %291 = vset.pattern.permute.xlu0 0
      %292 = vperm.xlu0 %291, %v258
      %v293 = vpop.permute.xlu0 %292
      %296 = vset.pattern.permute.xlu0 0
      %297 = vperm.xlu0 %296, %v259
      %v298 = vpop.permute.xlu0 %297
      %301 = vset.pattern.permute.xlu0 0
      %302 = vperm.xlu0 %301, %v260
      %v303 = vpop.permute.xlu0 %302
      %306 = vset.pattern.permute.xlu0 0
      %307 = vperm.xlu0 %306, %v261
      %v308 = vpop.permute.xlu0 %307
      %311 = vset.pattern.permute.xlu0 0
      %312 = vperm.xlu0 %311, %v262
      %v313 = vpop.permute.xlu0 %312
      %316 = vset.pattern.permute.xlu0 0
      %317 = vperm.xlu0 %316, %v263
      %v318 = vpop.permute.xlu0 %317
      %321 = vset.pattern.permute.xlu0 0
      %322 = vperm.xlu0 %321, %v264
      %v323 = vpop.permute.xlu0 %322
      %326 = vset.pattern.permute.xlu0 0
      %327 = vperm.xlu0 %326, %v265
      %v328 = vpop.permute.xlu0 %327
      %331 = vset.pattern.permute.xlu0 0
      %332 = vperm.xlu0 %331, %v266
      %v333 = vpop.permute.xlu0 %332
      %336 = vset.pattern.permute.xlu0 0
      %337 = vperm.xlu0 %336, %v267
      %v338 = vpop.permute.xlu0 %337
      %341 = vset.pattern.permute.xlu0 0
      %342 = vperm.xlu0 %341, %v268
      %v343 = vpop.permute.xlu0 %342
      %346 = vset.pattern.permute.xlu0 0
      %347 = vperm.xlu0 %346, %v269
      %v348 = vpop.permute.xlu0 %347
      %v350 = vmul.f32 %v192, %v273
      %v351 = vmul.f32 %v195, %v278
      %v352 = vmul.f32 %v200, %v283
      %v353 = vmul.f32 %v203, %v288
      %v354 = vmul.f32 %v208, %v293
      %v355 = vmul.f32 %v211, %v298
      %v356 = vmul.f32 %v216, %v303
      %v357 = vmul.f32 %v219, %v308
      %v358 = vmul.f32 %v224, %v313
      %v359 = vmul.f32 %v227, %v318
      %v360 = vmul.f32 %v232, %v323
      %v361 = vmul.f32 %v235, %v328
      %v362 = vmul.f32 %v240, %v333
      %v363 = vmul.f32 %v243, %v338
      %v364 = vmul.f32 %v248, %v343
      %v365 = vmul.f32 %v251, %v348
      %v366 = vpack.c.bf16 %v351, %v350
      %v367 = vpack.c.bf16 %v353, %v352
      %v368 = vpack.c.bf16 %v355, %v354
      %v369 = vpack.c.bf16 %v357, %v356
      %v370 = vpack.c.bf16 %v359, %v358
      %v371 = vpack.c.bf16 %v361, %v360
      %v372 = vpack.c.bf16 %v363, %v362
      %v373 = vpack.c.bf16 %v365, %v364
      %v382 = vunpack.c.l.b16 %v366
      %v383 = vunpack.c.h.b16 %v366
      %v384 = vunpack.c.l.b16 %v367
      %v385 = vunpack.c.h.b16 %v367
      %v386 = vunpack.c.l.b16 %v368
      %v387 = vunpack.c.h.b16 %v368
      %v388 = vunpack.c.l.b16 %v369
      %v389 = vunpack.c.h.b16 %v369
      %v390 = vunpack.c.l.b16 %v370
      %v391 = vunpack.c.h.b16 %v370
      %v392 = vunpack.c.l.b16 %v371
      %v393 = vunpack.c.h.b16 %v371
      %v394 = vunpack.c.l.b16 %v372
      %v395 = vunpack.c.h.b16 %v372
      %v396 = vunpack.c.l.b16 %v373
      %v397 = vunpack.c.h.b16 %v373
      %v398 = vpack.c.b16 %v382, %v382
      %v399 = vpack.c.b16 %v383, %v383
      %v400 = vpack.c.b16 %v384, %v384
      %v401 = vpack.c.b16 %v385, %v385
      %v402 = vpack.c.b16 %v386, %v386
      %v403 = vpack.c.b16 %v387, %v387
      %v404 = vpack.c.b16 %v388, %v388
      %v405 = vpack.c.b16 %v389, %v389
      %v406 = vpack.c.b16 %v390, %v390
      %v407 = vpack.c.b16 %v391, %v391
      %v408 = vpack.c.b16 %v392, %v392
      %v409 = vpack.c.b16 %v393, %v393
      %v410 = vpack.c.b16 %v394, %v394
      %v411 = vpack.c.b16 %v395, %v395
      %v412 = vpack.c.b16 %v396, %v396
      %v413 = vpack.c.b16 %v397, %v397
      %s430 = smul.u32 0, 16
      %s431 = smul.addr %s430, 4
      %s432 = scalar_lea.vmem [#allocation3], %s431
      %433 = vst [vmem:[%s432] sm:$0xf] %v398
      %434 = vst [vmem:[%s432 + $0x4] sm:$0xf] %v399
      %435 = vst [vmem:[%s432 + $0x8] sm:$0xf] %v400
      %436 = vst [vmem:[%s432 + $0xc] sm:$0xf] %v401
      %437 = vst [vmem:[%s432 + $0x10] sm:$0xf] %v402
      %438 = vst [vmem:[%s432 + $0x14] sm:$0xf] %v403
      %439 = vst [vmem:[%s432 + $0x18] sm:$0xf] %v404
      %440 = vst [vmem:[%s432 + $0x1c] sm:$0xf] %v405
      %441 = vst [vmem:[%s432 + $0x20] sm:$0xf] %v406
      %442 = vst [vmem:[%s432 + $0x24] sm:$0xf] %v407
      %443 = vst [vmem:[%s432 + $0x28] sm:$0xf] %v408
      %444 = vst [vmem:[%s432 + $0x2c] sm:$0xf] %v409
      %445 = vst [vmem:[%s432 + $0x30] sm:$0xf] %v410
      %446 = vst [vmem:[%s432 + $0x34] sm:$0xf] %v411
      %447 = vst [vmem:[%s432 + $0x38] sm:$0xf] %v412
      %448 = vst [vmem:[%s432 + $0x3c] sm:$0xf] %v413
    $region29: #{gcn_forward.5} parent=1 // pred_fallthru
      _
    %p449 = scmp.eq.s32.totalorder 0, 0
    // Predicated region
    $region30: #{gcn_forward.5} parent=1 // pred_check
      %p450 = pneg %p449
    $region31: #{gcn_forward.5} parent=1 // pred_check_branch
      %452 = sbr.rel (%p450) target = $region33
    $region32: #{gcn_forward.5} parent=1 // pred_region
      %453 = vst [vmem:[#allocation2] sm:$0xff] 0.0
      %454 = vst [vmem:[#allocation2 + $0x8] sm:$0xff] 0.0
    $region33: #{gcn_forward.5} parent=1 // pred_fallthru
      _
    %v455 = vld [vmem:[#allocation2] sm:$0xff]
    %v456 = vld [vmem:[#allocation2 + $0x8] sm:$0xff]
    %v457 = vld [vmem:[%s0] sm:$0xf]
    %v458 = vld [vmem:[%s0 + $0x4] sm:$0xf]
    %s459 = smul.u32 0, 16
    %s460 = smul.addr %s459, 4
    %s461 = scalar_lea.vmem [#allocation3], %s460
    %v462 = vld [vmem:[%s461] sm:$0xf]
    %v463 = vld [vmem:[%s461 + $0x4] sm:$0xf]
    %v464 = vld [vmem:[%s461 + $0x8] sm:$0xf]
    %v465 = vld [vmem:[%s461 + $0xc] sm:$0xf]
    %v466 = vld [vmem:[%s461 + $0x10] sm:$0xf]
    %v467 = vld [vmem:[%s461 + $0x14] sm:$0xf]
    %v468 = vld [vmem:[%s461 + $0x18] sm:$0xf]
    %v469 = vld [vmem:[%s461 + $0x1c] sm:$0xf]
    %v470 = vld [vmem:[%s461 + $0x20] sm:$0xf]
    %v471 = vld [vmem:[%s461 + $0x24] sm:$0xf]
    %v472 = vld [vmem:[%s461 + $0x28] sm:$0xf]
    %v473 = vld [vmem:[%s461 + $0x2c] sm:$0xf]
    %v474 = vld [vmem:[%s461 + $0x30] sm:$0xf]
    %v475 = vld [vmem:[%s461 + $0x34] sm:$0xf]
    %v476 = vld [vmem:[%s461 + $0x38] sm:$0xf]
    %v477 = vld [vmem:[%s461 + $0x3c] sm:$0xf]
    %v480 = vunpack.c.l.b16 %v457
    %v481 = vunpack.c.l.b16 %v458
    %v482 = vpack.c.b16 %v481, %v480
    %v500 = vunpack.c.l.b16 %v462
    %v501 = vunpack.c.l.b16 %v463
    %v502 = vunpack.c.l.b16 %v464
    %v503 = vunpack.c.l.b16 %v465
    %v504 = vunpack.c.l.b16 %v466
    %v505 = vunpack.c.l.b16 %v467
    %v506 = vunpack.c.l.b16 %v468
    %v507 = vunpack.c.l.b16 %v469
    %v508 = vunpack.c.l.b16 %v470
    %v509 = vunpack.c.l.b16 %v471
    %v510 = vunpack.c.l.b16 %v472
    %v511 = vunpack.c.l.b16 %v473
    %v512 = vunpack.c.l.b16 %v474
    %v513 = vunpack.c.l.b16 %v475
    %v514 = vunpack.c.l.b16 %v476
    %v515 = vunpack.c.l.b16 %v477
    %v516 = vpack.c.b16 %v501, %v500
    %v517 = vpack.c.b16 %v503, %v502
    %v518 = vpack.c.b16 %v505, %v504
    %v519 = vpack.c.b16 %v507, %v506
    %v520 = vpack.c.b16 %v509, %v508
    %v521 = vpack.c.b16 %v511, %v510
    %v522 = vpack.c.b16 %v513, %v512
    %v523 = vpack.c.b16 %v515, %v514
    %532 = vmatprep.subr.bf16.mxu0 0
    %533 = vmatpush1.bf16.msra.mxu0 %v523
    %534 = vmatprep.subr.bf16.mxu0 0
    %535 = vmatpush1.bf16.msra.mxu0 %v522
    %536 = vmatprep.subr.bf16.mxu0 0
    %537 = vmatpush1.bf16.msra.mxu0 %v521
    %538 = vmatprep.subr.bf16.mxu0 0
    %539 = vmatpush1.bf16.msra.mxu0 %v520
    %540 = vmatprep.subr.bf16.mxu0 0
    %541 = vmatpush1.bf16.msra.mxu0 %v519
    %542 = vmatprep.subr.bf16.mxu0 0
    %543 = vmatpush1.bf16.msra.mxu0 %v518
    %544 = vmatprep.subr.bf16.mxu0 0
    %545 = vmatpush1.bf16.msra.mxu0 %v517
    %546 = vmatprep.subr.bf16.mxu0 0
    %547 = vmatpush1.bf16.msra.mxu0 %v516
    %548 = vmatprep.subr.bf16.mxu0 0
    %549 = vmatpush2.bf16.msra.mxu0 0
    %550 = vmatprep.subr.bf16.mxu0 0
    %551 = vmatpush2.bf16.msra.mxu0 0
    %552 = vmatprep.subr.bf16.mxu0 0
    %553 = vmatpush2.bf16.msra.mxu0 0
    %554 = vmatprep.subr.bf16.mxu0 0
    %555 = vmatpush2.bf16.msra.mxu0 0
    %556 = vmatprep.subr.bf16.mxu0 0
    %557 = vmatpush2.bf16.msra.mxu0 0
    %558 = vmatprep.subr.bf16.mxu0 0
    %559 = vmatpush2.bf16.msra.mxu0 0
    %560 = vmatprep.subr.bf16.mxu0 0
    %561 = vmatpush2.bf16.msra.mxu0 0
    %562 = vmatprep.subr.bf16.mxu0 0
    %563 = vmatpush2.bf16.msra.mxu0 0
    %564 = vmatprep.mubr.bf16.mxu0 0
    %565 = vmatmul.mubr.bf16.gmra.mxu0 %v482
    %v566 = vpop.f32.mrf.mxu0
    %v567 = vadd.f32 0.0, %v566
    %v568 = vpop.f32.mrf.mxu0
    %v569 = vpop.f32.mrf.mxu0
    %v570 = vadd.f32 0.0, %v569
    %v571 = vpop.f32.mrf.mxu0
    %572 = vdwg.mxu0
    %v573 = vadd.f32 %v455, %v567
    %v574 = vadd.f32 %v456, %v570
    %575 = vst [vmem:[#allocation2] sm:$0xff] %v573
    %576 = vst [vmem:[#allocation2 + $0x8] sm:$0xff] %v574
    // Predicated region
    $region34: #{gcn_forward.5} parent=1 // pred_check
      %p577 = pneg %p449
    $region35: #{gcn_forward.5} parent=1 // pred_check_branch
      %579 = sbr.rel (%p577) target = $region37
    $region36: #{gcn_forward.5} parent=1 // pred_region
      %v580 = vld [vmem:[#allocation2] sm:$0xff]
      %v581 = vld [vmem:[#allocation2 + $0x8] sm:$0xff]
      %v582 = vld [vmem:[%s4] sm:$0xff]
      %v583 = vld [vmem:[%s4 + $0x8] sm:$0xff]
      %585 = vset.pattern.permute.xlu0 0
      %586 = vperm.xlu0 %585, %v582
      %v587 = vpop.permute.xlu0 %586
      %590 = vset.pattern.permute.xlu0 0
      %591 = vperm.xlu0 %590, %v583
      %v592 = vpop.permute.xlu0 %591
      %v594 = vmul.f32 %v580, %v587
      %v595 = vmul.f32 %v581, %v592
      %v596 = vld [vmem:[%s5] sm:$0x1]
      %v598 = vlaneseq
      %v599 = vshrl.u32 %v598, 7
      %v600 = vsub.s32 0, %v599
      %v601 = vrot.slane %v596, %v600
      %v603 = vadd.f32 %v594, %v601
      %v604 = vadd.f32 %v595, %v601
      %v605 = vpack.c.bf16 %v604, %v603
      %v607 = vunpack.c.l.b16 %v605
      %v608 = vunpack.c.h.b16 %v605
      %v609 = vpack.c.b16 %v607, %v607
      %v610 = vpack.c.b16 %v608, %v608
      %613 = vst [vmem:[#allocation4] sm:$0xf] %v609
      %614 = vst [vmem:[#allocation4 + $0x4] sm:$0xf] %v610
    $region37: #{gcn_forward.5} parent=1 // pred_fallthru
      _
    // Predicated region
    $region38: #{gcn_forward.5} parent=1 // pred_check
      _
    $region39: #{gcn_forward.5} parent=1 // pred_check_branch
      %616 = sbr.rel (0) target = $region41
    $region40: #{gcn_forward.5} parent=1 // pred_region
      %s618 = ssub.s32 128, 128
      %619 = vsyncadd [#allocation5], %s618
      %s620 = sshll.u32 [#allocation4], 4
      %s621 = int_to_ptr.vmem [resolvable:$true] %s620
      %626 = dma.vmem_to_hbm [thread:$0]  %s621, 128, %s6, [#allocation5], 64, 64, 4
    $region41: #{gcn_forward.5} parent=1 // pred_fallthru
      _
    // Predicated region
    $region42: #{gcn_forward.5} parent=1 // pred_check
      _
    $region43: #{gcn_forward.5} parent=1 // pred_check_branch
      %628 = sbr.rel (0) target = $region45
    $region44: #{gcn_forward.5} parent=1 // pred_region
      %629 = dma.done [#allocation5], 128
    $region45: #{gcn_forward.5} parent=1 // pred_fallthru
      _
    %630 = vsyncpa [#allocation5], 1

</llo_original>
